<compile_context>
chip_gen: v7x
topology: tpu7x:2x2x1
jax: 0.10.0
libtpu: 0.0.40
codegen_flags: <defaults>
</compile_context>

<pallas_src>
import jax
import jax.numpy as jnp
from jax.experimental import pallas as pl
from jax.experimental.pallas import tpu as pltpu


# ----------------------------------------------------------------------------
# Kernels
# ----------------------------------------------------------------------------
def _fused_kernel(x_ref, w1_ref, b1_ref, w2_ref, b2_ref, o_ref):
    # One batch tile per grid step; everything else (W1^T, b1, W2^T, b2) is resident.
    x = x_ref[...].astype(jnp.bfloat16)                       # in-kernel cast (VPU filler)
    h = jnp.dot(x, w1_ref[...], preferred_element_type=jnp.float32)
    h = jnp.tanh(h + b1_ref[...])                             # f32 bias + tanh (v5e-safe, EUP)
    out = jnp.dot(h.astype(jnp.bfloat16), w2_ref[...],
                  preferred_element_type=jnp.float32)
    o_ref[...] = (out + b2_ref[...]).astype(o_ref.dtype)


def _col_tiled_kernel(x_ref, w1_ref, b1_ref, w2_ref, b2_ref, o_ref, h_ref):
    # Fallback for very large n_items: tile the output columns, cache tanh(layer1)
    # in a bf16 VMEM scratch and reuse it across the column tiles of each batch tile.
    j = pl.program_id(1)

    @pl.when(j == 0)
    def _():
        x = x_ref[...].astype(jnp.bfloat16)
        h = jnp.dot(x, w1_ref[...], preferred_element_type=jnp.float32)
        h_ref[...] = jnp.tanh(h + b1_ref[...]).astype(h_ref.dtype)

    out = jnp.dot(h_ref[...], w2_ref[...], preferred_element_type=jnp.float32)
    o_ref[...] = (out + b2_ref[...]).astype(o_ref.dtype)


# ----------------------------------------------------------------------------
# Helpers
# ----------------------------------------------------------------------------
def _round_up(x, m):
    return (x + m - 1) // m * m


def _fused_vmem_bytes(block_b, n_items, n_hidden, x_bytes, out_bytes):
    x_tile = block_b * n_items * x_bytes
    out_tile = block_b * n_items * out_bytes
    weights = (n_items * n_hidden + n_hidden * n_items) * 2 + (n_hidden + n_items) * 4
    interm = block_b * n_hidden * (4 + 2 + 2) + block_b * n_items * 4
    return 2 * (x_tile + out_tile) + 2 * weights + interm     # 2x for double-buffering


def _vmem_limit(footprint_bytes):
    # Derive scoped-VMEM request from the footprint; cap at 48 MiB (v7x headroom).
    return int(min(48 << 20, max(footprint_bytes + (8 << 20), 32 << 20)))


_VMEM_BUDGET = 40 << 20   # conservative tile budget: fits v7x (64 MiB) with headroom


def _choose_block_b(B, n_items, n_hidden, x_bytes, out_bytes, requested):
    B128 = _round_up(max(B, 1), 128)
    block_b = min(_round_up(max(requested, 128), 128), B128)
    # Shrink the batch tile until the fused footprint fits the VMEM budget.
    while block_b > 128 and _fused_vmem_bytes(
            block_b, n_items, n_hidden, x_bytes, out_bytes) > _VMEM_BUDGET:
        block_b -= 128
    # Dual-TC (v7x): keep >= 2 steps on the parallel batch axis when B allows.
    if B128 // block_b < 2 and B128 >= 256:
        block_b = _round_up(B128 // 2, 128)
    B_pad = _round_up(B, block_b)
    return block_b, B_pad


# ----------------------------------------------------------------------------
# pallas_call builders
# ----------------------------------------------------------------------------
def _build_fused_call(B_pad, n_items, n_hidden, block_b, x_dtype, out_dtype):
    nb = B_pad // block_b
    x_bytes = jnp.dtype(x_dtype).itemsize
    out_bytes = jnp.dtype(out_dtype).itemsize

    flops = 2 * 2 * B_pad * n_items * n_hidden
    bytes_accessed = (B_pad * n_items * x_bytes
                      + (n_items * n_hidden + n_hidden * n_items) * 2
                      + (n_hidden + n_items) * 4
                      + B_pad * n_items * out_bytes)
    footprint = _fused_vmem_bytes(block_b, n_items, n_hidden, x_bytes, out_bytes)

    return pl.pallas_call(
        _fused_kernel,
        out_shape=jax.ShapeDtypeStruct((B_pad, n_items), out_dtype),
        grid_spec=pltpu.PrefetchScalarGridSpec(
            num_scalar_prefetch=0,
            grid=(nb,),
            in_specs=[
                pl.BlockSpec((block_b, n_items), lambda i: (i, 0)),   # x tile (full K)
                pl.BlockSpec((n_items, n_hidden), lambda i: (0, 0)),  # W1^T (resident, bf16)
                pl.BlockSpec((1, n_hidden), lambda i: (0, 0)),        # b1 (resident, f32)
                pl.BlockSpec((n_hidden, n_items), lambda i: (0, 0)),  # W2^T (resident, bf16)
                pl.BlockSpec((1, n_items), lambda i: (0, 0)),         # b2 (resident, f32)
            ],
            out_specs=pl.BlockSpec((block_b, n_items), lambda i: (i, 0)),
        ),
        compiler_params=pltpu.CompilerParams(
            dimension_semantics=("parallel",),
            vmem_limit_bytes=_vmem_limit(footprint),
        ),
        cost_estimate=pl.CostEstimate(
            flops=flops,
            transcendentals=B_pad * n_hidden,
            bytes_accessed=bytes_accessed,
        ),
    )


def _build_col_tiled_call(B_pad, n_items, n_hidden, block_b, block_n, x_dtype, out_dtype):
    nb = B_pad // block_b
    nj = n_items // block_n
    x_bytes = jnp.dtype(x_dtype).itemsize
    out_bytes = jnp.dtype(out_dtype).itemsize

    flops = 2 * 2 * B_pad * n_items * n_hidden
    bytes_accessed = (B_pad * n_items * x_bytes * nj          # x re-fetched per column tile
                      + n_items * n_hidden * 2 + n_hidden * 4
                      + n_hidden * n_items * 2 * nb + n_items * 4
                      + B_pad * n_items * out_bytes)
    footprint = (2 * (block_b * n_items * x_bytes
                      + block_b * block_n * out_bytes
                      + n_hidden * block_n * 2 + block_n * 4)
                 + 2 * (n_items * n_hidden * 2 + n_hidden * 4)
                 + block_b * n_hidden * (4 + 2)
                 + block_b * block_n * 4)

    return pl.pallas_call(
        _col_tiled_kernel,
        out_shape=jax.ShapeDtypeStruct((B_pad, n_items), out_dtype),
        grid_spec=pltpu.PrefetchScalarGridSpec(
            num_scalar_prefetch=0,
            grid=(nb, nj),
            in_specs=[
                pl.BlockSpec((block_b, n_items), lambda i, j: (i, 0)),   # x tile
                pl.BlockSpec((n_items, n_hidden), lambda i, j: (0, 0)),  # W1^T (resident)
                pl.BlockSpec((1, n_hidden), lambda i, j: (0, 0)),        # b1 (resident)
                pl.BlockSpec((n_hidden, block_n), lambda i, j: (0, j)),  # W2^T column tile
                pl.BlockSpec((1, block_n), lambda i, j: (0, j)),         # b2 tile
            ],
            out_specs=pl.BlockSpec((block_b, block_n), lambda i, j: (i, j)),
            scratch_shapes=[pltpu.VMEM((block_b, n_hidden), jnp.bfloat16)],
        ),
        compiler_params=pltpu.CompilerParams(
            # j must stay innermost & un-sharded: the h scratch is written at j==0
            # and reused for j>0 of the same batch tile.
            dimension_semantics=("parallel", "arbitrary"),
            vmem_limit_bytes=_vmem_limit(footprint),
        ),
        cost_estimate=pl.CostEstimate(
            flops=flops,
            transcendentals=B_pad * n_hidden,
            bytes_accessed=bytes_accessed,
        ),
    )


# ----------------------------------------------------------------------------
# Public API
# ----------------------------------------------------------------------------
def prepare_params(w1_t, b1, w2_t, b2):
    """One-time parameter preparation: bf16 weights (MXU operands), f32 biases."""
    return (w1_t.astype(jnp.bfloat16),
            jnp.asarray(b1, jnp.float32).reshape(1, -1),
            w2_t.astype(jnp.bfloat16),
            jnp.asarray(b2, jnp.float32).reshape(1, -1))


def autoencoder_forward(x, w1_t, b1, w2_t, b2, *, block_b=512, out_dtype=None,
                        is_train=False):
    """Forward pass of the autoencoder: layer2(tanh(layer1(x))).

    x:    (B, n_items)
    w1_t: (n_items, n_hidden)  == torch layer1.weight.T   (ideally pre-cast to bf16)
    b1:   (1, n_hidden)
    w2_t: (n_hidden, n_items)  == torch layer2.weight.T   (ideally pre-cast to bf16)
    b2:   (1, n_items)
    """
    # TODO(synk): training-mode Dropout(0.7) on the input is not implemented;
    # this matches the module's default is_train=False path.
    del is_train

    B, n_items = x.shape
    n_hidden = w1_t.shape[1]
    out_dtype = x.dtype if out_dtype is None else out_dtype
    x_bytes = jnp.dtype(x.dtype).itemsize
    out_bytes = jnp.dtype(out_dtype).itemsize

    # No-op when prepare_params() was used; avoids per-call HBM passes otherwise.
    w1_bf = w1_t if w1_t.dtype == jnp.bfloat16 else w1_t.astype(jnp.bfloat16)
    w2_bf = w2_t if w2_t.dtype == jnp.bfloat16 else w2_t.astype(jnp.bfloat16)
    b1_f = jnp.asarray(b1, jnp.float32).reshape(1, n_hidden)
    b2_f = jnp.asarray(b2, jnp.float32).reshape(1, n_items)

    block_b, B_pad = _choose_block_b(B, n_items, n_hidden, x_bytes, out_bytes, block_b)
    x_p = x if B_pad == B else jnp.pad(x, ((0, B_pad - B), (0, 0)))

    if _fused_vmem_bytes(block_b, n_items, n_hidden, x_bytes, out_bytes) <= _VMEM_BUDGET:
        # Hot path: single grid axis, everything resident, lane-dense output store.
        call = _build_fused_call(B_pad, n_items, n_hidden, block_b, x.dtype, out_dtype)
    else:
        # Very large n_items: tile the output columns (keeps tiles small/lane-dense).
        block_n = 512 if n_items % 512 == 0 else n_items
        call = _build_col_tiled_call(B_pad, n_items, n_hidden, block_b, block_n,
                                     x.dtype, out_dtype)

    out = call(x_p, w1_bf, b1_f, w2_bf, b2_f)
    return out[:B] if B_pad != B else out


# ----------------------------------------------------------------------------
# References + demo
# ----------------------------------------------------------------------------
def _ref_forward(x, w1_t, b1, w2_t, b2):
    h = jnp.tanh(x @ w1_t + b1)
    return h @ w2_t + b2


def _ref_forward_bf16(x, w1_t, b1, w2_t, b2):
    # Mirrors the kernel's bf16-operand / f32-accumulate math.
    h = jnp.dot(x.astype(jnp.bfloat16), w1_t.astype(jnp.bfloat16),
                preferred_element_type=jnp.float32) + b1.astype(jnp.float32)
    h = jnp.tanh(h).astype(jnp.bfloat16)
    out = jnp.dot(h, w2_t.astype(jnp.bfloat16),
                  preferred_element_type=jnp.float32) + b2.astype(jnp.float32)
    return out


if __name__ == "__main__":
    B = 500            # deliberately not a multiple of the batch tile (exercises padding)
    n_items = 512
    n_hidden = 256

    key = jax.random.PRNGKey(0)
    kx, kw1, kb1, kw2, kb2 = jax.random.split(key, 5)

    # nn.Linear-style uniform(-1/sqrt(fan_in), 1/sqrt(fan_in)) init.
    lim1 = 1.0 / jnp.sqrt(jnp.float32(n_items))
    lim2 = 1.0 / jnp.sqrt(jnp.float32(n_hidden))
    w1_t = jax.random.uniform(kw1, (n_items, n_hidden), jnp.float32, -lim1, lim1)
    b1 = jax.random.uniform(kb1, (1, n_hidden), jnp.float32, -lim1, lim1)
    w2_t = jax.random.uniform(kw2, (n_hidden, n_items), jnp.float32, -lim2, lim2)
    b2 = jax.random.uniform(kb2, (1, n_items), jnp.float32, -lim2, lim2)

    x = jax.random.normal(kx, (B, n_items), jnp.float32)

    # Cast weights to bf16 once (setup time), not per forward call.
    w1_bf, b1_f, w2_bf, b2_f = prepare_params(w1_t, b1, w2_t, b2)

    out = autoencoder_forward(x, w1_bf, b1_f, w2_bf, b2_f, block_b=512)
    out = jax.block_until_ready(out)
    assert out.shape == (B, n_items)
    assert out.dtype == x.dtype

    # Tight check vs. a reference doing the same bf16-operand math.
    ref_bf16 = _ref_forward_bf16(x, w1_t, b1, w2_t, b2)
    assert jnp.allclose(out, ref_bf16, atol=5e-3, rtol=5e-3), \
        float(jnp.max(jnp.abs(out - ref_bf16)))

    # Loose check vs. the full-f32 reference (bf16 operands, f32 accumulation).
    ref_f32 = _ref_forward(x, w1_t, b1, w2_t, b2)
    assert jnp.allclose(out, ref_f32, atol=5e-2, rtol=5e-2), \
        float(jnp.max(jnp.abs(out - ref_f32)))

    print("KERNEL_OK")
</pallas_src>

<mosaic_0001>
module attributes {stable_mosaic.version = 11 : i64} {
  func.func @_fused_kernel(%arg0: i32, %arg1: memref<256x512xf32, #tpu.memory_space<vmem>>, %arg2: memref<512x256xbf16, #tpu.memory_space<vmem>>, %arg3: memref<1x256xf32, #tpu.memory_space<vmem>>, %arg4: memref<256x512xbf16, #tpu.memory_space<vmem>>, %arg5: memref<1x512xf32, #tpu.memory_space<vmem>>, %arg6: memref<256x512xf32, #tpu.memory_space<vmem>>) attributes {dimension_semantics = [#tpu.dimension_semantics<parallel>], iteration_bounds = array<i64: 2>, scalar_prefetch = 0 : i64, scratch_operands = 0 : i64, tpu.core_type = #tpu.core_type<tc>, window_params = [{transform_indices = @transform_0, window_bounds = array<i64: 256, 512>}, {pipeline_mode = #tpu.pipeline_mode<synchronous>, transform_indices = @transform_1, window_bounds = array<i64: 512, 256>}, {pipeline_mode = #tpu.pipeline_mode<synchronous>, transform_indices = @transform_2, window_bounds = array<i64: 1, 256>}, {pipeline_mode = #tpu.pipeline_mode<synchronous>, transform_indices = @transform_3, window_bounds = array<i64: 256, 512>}, {pipeline_mode = #tpu.pipeline_mode<synchronous>, transform_indices = @transform_4, window_bounds = array<i64: 1, 512>}, {transform_indices = @transform_5, window_bounds = array<i64: 256, 512>}]} {
    %c0 = arith.constant 0 : index
    %c0_0 = arith.constant 0 : index
    %0 = vector.load %arg1[%c0, %c0_0] : memref<256x512xf32, #tpu.memory_space<vmem>>, vector<256x512xf32>
    %1 = arith.truncf %0 : vector<256x512xf32> to vector<256x512xbf16>
    %c0_1 = arith.constant 0 : index
    %c0_2 = arith.constant 0 : index
    %2 = vector.load %arg2[%c0_1, %c0_2] : memref<512x256xbf16, #tpu.memory_space<vmem>>, vector<512x256xbf16>
    %cst = arith.constant dense<0.000000e+00> : vector<256x256xf32>
    %3 = tpu.matmul %1, %2, %cst {dimension_numbers = #tpu.dot_dimension_numbers<[1], [0], [0], [1], [0, 0, 1, 1], [], []>} : vector<256x512xbf16>, vector<512x256xbf16>, vector<256x256xf32> -> vector<256x256xf32>
    %c0_3 = arith.constant 0 : index
    %c0_4 = arith.constant 0 : index
    %4 = vector.load %arg3[%c0_3, %c0_4] : memref<1x256xf32, #tpu.memory_space<vmem>>, vector<1x256xf32>
    %5 = vector.broadcast %4 : vector<1x256xf32> to vector<256x256xf32>
    %6 = arith.addf %3, %5 : vector<256x256xf32>
    %7 = math.tanh %6 : vector<256x256xf32>
    %8 = arith.truncf %7 : vector<256x256xf32> to vector<256x256xbf16>
    %c0_5 = arith.constant 0 : index
    %c0_6 = arith.constant 0 : index
    %9 = vector.load %arg4[%c0_5, %c0_6] : memref<256x512xbf16, #tpu.memory_space<vmem>>, vector<256x512xbf16>
    %cst_7 = arith.constant dense<0.000000e+00> : vector<256x512xf32>
    %10 = tpu.matmul %8, %9, %cst_7 {dimension_numbers = #tpu.dot_dimension_numbers<[1], [0], [0], [1], [0, 0, 1, 1], [], []>} : vector<256x256xbf16>, vector<256x512xbf16>, vector<256x512xf32> -> vector<256x512xf32>
    %c0_8 = arith.constant 0 : index
    %c0_9 = arith.constant 0 : index
    %11 = vector.load %arg5[%c0_8, %c0_9] : memref<1x512xf32, #tpu.memory_space<vmem>>, vector<1x512xf32>
    %12 = vector.broadcast %11 : vector<1x512xf32> to vector<256x512xf32>
    %13 = arith.addf %10, %12 : vector<256x512xf32>
    %c0_10 = arith.constant 0 : index
    %c0_11 = arith.constant 0 : index
    %14 = vector.load %arg6[%c0_10, %c0_11] : memref<256x512xf32, #tpu.memory_space<vmem>>, vector<256x512xf32>
    tpu.vector_store %arg6[%c0_10, %c0_11], %13 {strides = array<i32>} : memref<256x512xf32, #tpu.memory_space<vmem>>, vector<256x512xf32>,
    return
  }
  func.func @transform_0(%arg0: i32) -> (i32, i32) {
    %c0_i32 = arith.constant 0 : i32
    %c0_i32_0 = arith.constant 0 : i32
    return %arg0, %c0_i32 : i32, i32
  }
  func.func @transform_1(%arg0: i32) -> (i32, i32) {
    %c0_i32 = arith.constant 0 : i32
    %c0_i32_0 = arith.constant 0 : i32
    %c0_i32_1 = arith.constant 0 : i32
    return %c0_i32, %c0_i32_0 : i32, i32
  }
  func.func @transform_2(%arg0: i32) -> (i32, i32) {
    %c0_i32 = arith.constant 0 : i32
    %c0_i32_0 = arith.constant 0 : i32
    %c0_i32_1 = arith.constant 0 : i32
    return %c0_i32, %c0_i32_0 : i32, i32
  }
  func.func @transform_3(%arg0: i32) -> (i32, i32) {
    %c0_i32 = arith.constant 0 : i32
    %c0_i32_0 = arith.constant 0 : i32
    %c0_i32_1 = arith.constant 0 : i32
    return %c0_i32, %c0_i32_0 : i32, i32
  }
  func.func @transform_4(%arg0: i32) -> (i32, i32) {
    %c0_i32 = arith.constant 0 : i32
    %c0_i32_0 = arith.constant 0 : i32
    %c0_i32_1 = arith.constant 0 : i32
    return %c0_i32, %c0_i32_0 : i32, i32
  }
  func.func @transform_5(%arg0: i32) -> (i32, i32) {
    %c0_i32 = arith.constant 0 : i32
    %c0_i32_0 = arith.constant 0 : i32
    return %arg0, %c0_i32 : i32, i32
  }
}

</mosaic_0001>

<llo_original>
// kernel: tpu_custom_call.1
$region0: #{tpu_custom_call.1}
  #allocation0 [shape = 'u32[]', space=smem, size = 0x4, offset = 0x4, fixed_abs, tag = 'smem constant byte address 0x4 - core index']
  #allocation1 [shape = 'u32[144,128]{1,0:T(1,128)}', space=vmem, size = 0x12000, scoped, tag = 'internal scratch']
  %s0 = inlined_call_operand.hbm [shape: f32[512,512], index: 0, kind: input, shape index: {}]
  %s1 = inlined_call_operand.hbm [shape: bf16[512,256], index: 1, kind: input, shape index: {}]
  %s2 = inlined_call_operand.vmem [shape: f32[1,256], index: 2, kind: input, shape index: {}]
  %s3 = inlined_call_operand.hbm [shape: bf16[256,512], index: 3, kind: input, shape index: {}]
  %s4 = inlined_call_operand.vmem [shape: f32[1,512], index: 4, kind: input, shape index: {}]
  %s5 = inlined_call_operand.hbm [shape: f32[512,512], index: 5, kind: output, shape index: {}]
  %s6 = sld [smem:[#allocation0]]
  $region65: #{tpu_custom_call.1} parent=0
    _
  %s8 = ssub.s32 1, %s6
  %s9 = scalar_select 0, %s8, %s6
  $region1: #{tpu_custom_call.1} parent=0
    #allocation2 [shape = 'u8[1048576]{0}', space=vmem, size = 0x100000, scoped, tag = 'input window, operand 0']
    #allocation3 [shape = 's32[2]{0}', space=sflag, size = 0x8, scoped, tag = 'scoped memory for tpu_custom_call.1']
    #allocation4 [shape = 's32[2]{0}', space=sflag, size = 0x8, scoped, tag = 'scoped memory for tpu_custom_call.1']
    #allocation5 [shape = 'u8[262144]{0}', space=vmem, size = 0x40000, scoped, tag = 'input window, operand 1, single buffered']
    #allocation6 [shape = 's32[1]{0}', space=sflag, size = 0x4, scoped, tag = 'scoped memory for tpu_custom_call.1']
    #allocation7 [shape = 'u8[262144]{0}', space=vmem, size = 0x40000, scoped, tag = 'input window, operand 3, single buffered']
    #allocation8 [shape = 'u8[1048576]{0}', space=vmem, size = 0x100000, scoped, tag = 'output window, operand 0']
    %10 = vsyncpa [#allocation3], 0
    %s11 = scalar_lea.sflag [#allocation3], 1
    %12 = vsyncpa %s11, 0
    %13 = vsyncpa [#allocation6], 0
    %14 = vsyncpa [#allocation4], 0
    %s15 = scalar_lea.sflag [#allocation4], 1
    %16 = vsyncpa %s15, 0
    loop: start=0, step=1, limit=4
    $region2: #{tpu_custom_call.1} parent=1 // loop_pre_header
      _
    $region3: #{tpu_custom_call.1} parent=1 // loop_header
      %s18 = sphi 0, %s22
      %p19 = scmp.ge.s32.totalorder %s18, 4
      %s28 = sphi 0, %s30
      %s31 = sphi 0, %s28
      %s32 = sphi 0, %s31
      %s48 = sphi 0, %s32
      %s52 = sphi 0, %s52
      %s54 = sphi 0, %s52
      %s55 = sphi 0, %s54
      %s69 = sphi 0, %s55
      %s73 = sphi 0, %s73
      %s75 = sphi 0, %s73
      %s76 = sphi 0, %s75
      %s90 = sphi 0, %s76
      %s94 = sphi 0, %s94
      %s96 = sphi 0, %s94
      %s97 = sphi 0, %s96
      %s111 = sphi 0, %s97
      %s115 = sphi 0, %s115
      %s117 = sphi 0, %s115
      %s118 = sphi 0, %s117
      %s132 = sphi 0, %s118
      %s138 = sphi 0, %s140
      %s141 = sphi 0, %s138
      %s142 = sphi 0, %s141
      %s158 = sphi 0, %s142
    $region4: #{tpu_custom_call.1} parent=1 // loop_header_branch
      %21 = sbr.rel (%p19) target = $region8
    $region5: #{tpu_custom_call.1} parent=1 // loop_body
      %s23 = ssub.s32 %s18, 1
      %s24 = ssub.s32 %s18, 2
      %s25 = sadd.s32 %s18, 1
      %s26 = ssub.s32 %s18, %s25
      %p27 = scmp.eq.s32.totalorder %s26, 0
      %s29 = sadd.s32 %s28, 1
      %s30 = scalar_select %p27, %s28, %s29
      %p33 = pneg %p27
      %p34 = scmp.eq.s32.totalorder %s18, 1
      %p35 = por %p33, %p34
      %p36 = scmp.ne.s32.totalorder %s28, %s31
      %p37 = scmp.eq.s32.totalorder %s18, 0
      %p38 = por %p36, %p37
      %p39 = scmp.ne.s32.totalorder %s28, %s31
      %p40 = scmp.eq.s32.totalorder %s23, 1
      %p41 = por %p39, %p40
      %p42 = scmp.ne.s32.totalorder %s31, %s32
      %p43 = scmp.eq.s32.totalorder %s23, 0
      %p44 = por %p42, %p43
      %p45 = scmp.ne.s32.totalorder %s31, %s32
      %p46 = scmp.eq.s32.totalorder %s24, 1
      %p47 = por %p45, %p46
      %p49 = scmp.ne.s32.totalorder %s32, %s48
      %p50 = scmp.eq.s32.totalorder %s24, 0
      %p51 = por %p49, %p50
      %s53 = sadd.s32 %s52, 1
      %p56 = scmp.eq.s32.totalorder %s18, 1
      %p57 = scmp.ne.s32.totalorder %s52, %s54
      %p58 = scmp.eq.s32.totalorder %s18, 0
      %p59 = por %p57, %p58
      %p60 = scmp.ne.s32.totalorder %s52, %s54
      %p61 = scmp.eq.s32.totalorder %s23, 1
      %p62 = por %p60, %p61
      %p63 = scmp.ne.s32.totalorder %s54, %s55
      %p64 = scmp.eq.s32.totalorder %s23, 0
      %p65 = por %p63, %p64
      %p66 = scmp.ne.s32.totalorder %s54, %s55
      %p67 = scmp.eq.s32.totalorder %s24, 1
      %p68 = por %p66, %p67
      %p70 = scmp.ne.s32.totalorder %s55, %s69
      %p71 = scmp.eq.s32.totalorder %s24, 0
      %p72 = por %p70, %p71
      %s74 = sadd.s32 %s73, 1
      %p77 = scmp.eq.s32.totalorder %s18, 1
      %p78 = scmp.ne.s32.totalorder %s73, %s75
      %p79 = scmp.eq.s32.totalorder %s18, 0
      %p80 = por %p78, %p79
      %p81 = scmp.ne.s32.totalorder %s73, %s75
      %p82 = scmp.eq.s32.totalorder %s23, 1
      %p83 = por %p81, %p82
      %p84 = scmp.ne.s32.totalorder %s75, %s76
      %p85 = scmp.eq.s32.totalorder %s23, 0
      %p86 = por %p84, %p85
      %p87 = scmp.ne.s32.totalorder %s75, %s76
      %p88 = scmp.eq.s32.totalorder %s24, 1
      %p89 = por %p87, %p88
      %p91 = scmp.ne.s32.totalorder %s76, %s90
      %p92 = scmp.eq.s32.totalorder %s24, 0
      %p93 = por %p91, %p92
      %s95 = sadd.s32 %s94, 1
      %p98 = scmp.eq.s32.totalorder %s18, 1
      %p99 = scmp.ne.s32.totalorder %s94, %s96
      %p100 = scmp.eq.s32.totalorder %s18, 0
      %p101 = por %p99, %p100
      %p102 = scmp.ne.s32.totalorder %s94, %s96
      %p103 = scmp.eq.s32.totalorder %s23, 1
      %p104 = por %p102, %p103
      %p105 = scmp.ne.s32.totalorder %s96, %s97
      %p106 = scmp.eq.s32.totalorder %s23, 0
      %p107 = por %p105, %p106
      %p108 = scmp.ne.s32.totalorder %s96, %s97
      %p109 = scmp.eq.s32.totalorder %s24, 1
      %p110 = por %p108, %p109
      %p112 = scmp.ne.s32.totalorder %s97, %s111
      %p113 = scmp.eq.s32.totalorder %s24, 0
      %p114 = por %p112, %p113
      %s116 = sadd.s32 %s115, 1
      %p119 = scmp.eq.s32.totalorder %s18, 1
      %p120 = scmp.ne.s32.totalorder %s115, %s117
      %p121 = scmp.eq.s32.totalorder %s18, 0
      %p122 = por %p120, %p121
      %p123 = scmp.ne.s32.totalorder %s115, %s117
      %p124 = scmp.eq.s32.totalorder %s23, 1
      %p125 = por %p123, %p124
      %p126 = scmp.ne.s32.totalorder %s117, %s118
      %p127 = scmp.eq.s32.totalorder %s23, 0
      %p128 = por %p126, %p127
      %p129 = scmp.ne.s32.totalorder %s117, %s118
      %p130 = scmp.eq.s32.totalorder %s24, 1
      %p131 = por %p129, %p130
      %p133 = scmp.ne.s32.totalorder %s118, %s132
      %p134 = scmp.eq.s32.totalorder %s24, 0
      %p135 = por %p133, %p134
      %s136 = ssub.s32 %s18, %s25
      %p137 = scmp.eq.s32.totalorder %s136, 0
      %s139 = sadd.s32 %s138, 1
      %s140 = scalar_select %p137, %s138, %s139
      %p143 = pneg %p137
      %p144 = scmp.eq.s32.totalorder %s18, 1
      %p145 = por %p143, %p144
      %p146 = scmp.ne.s32.totalorder %s138, %s141
      %p147 = scmp.eq.s32.totalorder %s18, 0
      %p148 = por %p146, %p147
      %p149 = scmp.ne.s32.totalorder %s138, %s141
      %p150 = scmp.eq.s32.totalorder %s23, 1
      %p151 = por %p149, %p150
      %p152 = scmp.ne.s32.totalorder %s141, %s142
      %p153 = scmp.eq.s32.totalorder %s23, 0
      %p154 = por %p152, %p153
      %p155 = scmp.ne.s32.totalorder %s141, %s142
      %p156 = scmp.eq.s32.totalorder %s24, 1
      %p157 = por %p155, %p156
      %p159 = scmp.ne.s32.totalorder %s142, %s158
      %p160 = scmp.eq.s32.totalorder %s24, 0
      %p161 = por %p159, %p160
      %p162 = scmp.le.s32.totalorder 1, %s18
      %p163 = scmp.lt.s32.totalorder %s18, 3
      %p164 = pnand %p162, %p163
      %p165 = pneg %p164
      // Predicated region
      $region9: #{tpu_custom_call.1} parent=5 // pred_check
        _
      $region10: #{tpu_custom_call.1} parent=5 // pred_check_branch
        %167 = sbr.rel (%p164) target = $region12
      $region11: #{tpu_custom_call.1} parent=5 // pred_region
        %s168 = ssub.s32 %s18, 1
        // Predicated region
        $region13: #{tpu_custom_call.1} parent=11 // pred_check
          %p169 = pneg %p65
        $region14: #{tpu_custom_call.1} parent=11 // pred_check_branch
          %171 = sbr.rel (%p169) target = $region16
        $region15: #{tpu_custom_call.1} parent=11 // pred_region
          %s173 = ssub.s32 8192, 8192
          %174 = vsyncadd [#allocation6], %s173
          %s175 = sshll.u32 [#allocation5], 4
          %s176 = int_to_ptr.vmem [resolvable:$true] %s175
          %181 = dma.hbm_to_vmem [thread:$0]  %s1, 8192, %s176, [#allocation6], 128, 128, 8
        $region16: #{tpu_custom_call.1} parent=11 // pred_fallthru
          _
        // Predicated region
        $region17: #{tpu_custom_call.1} parent=11 // pred_check
          %p182 = pneg %p86
        $region18: #{tpu_custom_call.1} parent=11 // pred_check_branch
          %184 = sbr.rel (%p182) target = $region20
        $region19: #{tpu_custom_call.1} parent=11 // pred_region
          _
        $region20: #{tpu_custom_call.1} parent=11 // pred_fallthru
          _
        // Predicated region
        $region21: #{tpu_custom_call.1} parent=11 // pred_check
          %p185 = pneg %p107
        $region22: #{tpu_custom_call.1} parent=11 // pred_check_branch
          %187 = sbr.rel (%p185) target = $region24
        $region23: #{tpu_custom_call.1} parent=11 // pred_region
          %s189 = ssub.s32 8192, 8192
          %190 = vsyncadd [#allocation6], %s189
          %s191 = sshll.u32 [#allocation7], 4
          %s192 = int_to_ptr.vmem [resolvable:$true] %s191
          %197 = dma.hbm_to_vmem [thread:$0]  %s3, 8192, %s192, [#allocation6], 256, 256, 16
        $region24: #{tpu_custom_call.1} parent=11 // pred_fallthru
          _
        // Predicated region
        $region25: #{tpu_custom_call.1} parent=11 // pred_check
          %p198 = pneg %p128
        $region26: #{tpu_custom_call.1} parent=11 // pred_check_branch
          %200 = sbr.rel (%p198) target = $region28
        $region27: #{tpu_custom_call.1} parent=11 // pred_region
          _
        $region28: #{tpu_custom_call.1} parent=11 // pred_fallthru
          _
      $region12: #{tpu_custom_call.1} parent=5 // pred_fallthru
        _
      %p201 = scmp.lt.s32.totalorder %s18, 2
      // Predicated region
      $region29: #{tpu_custom_call.1} parent=5 // pred_check
        %p202 = pneg %p201
      $region30: #{tpu_custom_call.1} parent=5 // pred_check_branch
        %204 = sbr.rel (%p202) target = $region32
      $region31: #{tpu_custom_call.1} parent=5 // pred_region
        // Predicated region
        $region33: #{tpu_custom_call.1} parent=31 // pred_check
          %p205 = pneg %p38
        $region34: #{tpu_custom_call.1} parent=31 // pred_check_branch
          %207 = sbr.rel (%p205) target = $region36
        $region35: #{tpu_custom_call.1} parent=31 // pred_region
          %s208 = sand.u32 %s28, 1
          %s209 = scalar_lea.sflag [#allocation3], %s208
          %s210 = sand.u32 %s28, 1
          %s211 = smul.addr %s210, 1024
          %s212 = scalar_lea.vmem [#allocation2], %s211
          %s213 = smul.u32 32, %s18
          %s215 = ssub.s32 16384, 16384
          %216 = vsyncadd %s209, %s215
          %s217 = smul.addr %s213, 4
          %s218 = smul.addr %s217, 128
          %s219 = scalar_lea.hbm %s0, %s218
          %s220 = sshll.u32 %s212, 4
          %s221 = int_to_ptr.vmem [resolvable:$true] %s220
          %226 = dma.hbm_to_vmem [thread:$0]  %s219, 16384, %s221, %s209, 512, 512, 32
        $region36: #{tpu_custom_call.1} parent=31 // pred_fallthru
          _
      $region32: #{tpu_custom_call.1} parent=5 // pred_fallthru
        _
      %p227 = scmp.le.s32.totalorder 1, %s18
      %p228 = scmp.lt.s32.totalorder %s18, 3
      %p229 = pnand %p227, %p228
      %p230 = pneg %p229
      // Predicated region
      $region37: #{tpu_custom_call.1} parent=5 // pred_check
        _
      $region38: #{tpu_custom_call.1} parent=5 // pred_check_branch
        %232 = sbr.rel (%p229) target = $region40
      $region39: #{tpu_custom_call.1} parent=5 // pred_region
        %s233 = ssub.s32 %s18, 1
        %s234 = sand.u32 %s31, 1
        %s235 = scalar_lea.sflag [#allocation3], %s234
        %s236 = sand.u32 %s31, 1
        %s237 = smul.addr %s236, 1024
        %s238 = scalar_lea.vmem [#allocation2], %s237
        // Predicated region
        $region41: #{tpu_custom_call.1} parent=39 // pred_check
          %p239 = pneg %p44
        $region42: #{tpu_custom_call.1} parent=39 // pred_check_branch
          %241 = sbr.rel (%p239) target = $region44
        $region43: #{tpu_custom_call.1} parent=39 // pred_region
          %242 = dma.done %s235, 16384
        $region44: #{tpu_custom_call.1} parent=39 // pred_fallthru
          _
        // Predicated region
        $region45: #{tpu_custom_call.1} parent=39 // pred_check
          %p243 = pneg %p65
        $region46: #{tpu_custom_call.1} parent=39 // pred_check_branch
          %245 = sbr.rel (%p243) target = $region48
        $region47: #{tpu_custom_call.1} parent=39 // pred_region
          %246 = dma.done [#allocation6], 8192
        $region48: #{tpu_custom_call.1} parent=39 // pred_fallthru
          _
        // Predicated region
        $region49: #{tpu_custom_call.1} parent=39 // pred_check
          %p247 = pneg %p107
        $region50: #{tpu_custom_call.1} parent=39 // pred_check_branch
          %249 = sbr.rel (%p247) target = $region52
        $region51: #{tpu_custom_call.1} parent=39 // pred_region
          %250 = dma.done [#allocation6], 8192
        $region52: #{tpu_custom_call.1} parent=39 // pred_fallthru
          _
        %s251 = sand.u32 %s31, 1
        %s252 = scalar_lea.sflag [#allocation3], %s251
        %s253 = sand.u32 %s31, 1
        %s254 = smul.addr %s253, 1024
        %s255 = scalar_lea.vmem [#allocation2], %s254
        %p256 = pneg %p44
        %p257 = pneg %p41
        %p258 = pneg %p65
        %p259 = pneg %p62
        %p260 = pneg %p86
        %p261 = pneg %p83
        %p262 = pneg %p107
        %p263 = pneg %p104
        %p264 = pneg %p128
        %p265 = pneg %p125
        %p266 = pneg %p154
        %p267 = pneg %p151
        %s268 = sand.u32 %s141, 1
        %s269 = scalar_lea.sflag [#allocation4], %s268
        %s270 = sand.u32 %s141, 1
        %s271 = smul.addr %s270, 1024
        %s272 = scalar_lea.vmem [#allocation8], %s271
        %s273 = smul.u32 32, %s23
        %s274 = smul.u32 32, %s23
        %v275 = vld [vmem:[%s238] sm:$0xff]
        %v276 = vld [vmem:[%s238 + $0x8] sm:$0xff]
        %v277 = vld [vmem:[%s238 + $0x10] sm:$0xff]
        %v278 = vld [vmem:[%s238 + $0x18] sm:$0xff]
        %v279 = vld [vmem:[%s238 + $0x20] sm:$0xff]
        %v280 = vld [vmem:[%s238 + $0x28] sm:$0xff]
        %v281 = vld [vmem:[%s238 + $0x30] sm:$0xff]
        %v282 = vld [vmem:[%s238 + $0x38] sm:$0xff]
        %v283 = vld [vmem:[%s238 + $0x40] sm:$0xff]
        %v284 = vld [vmem:[%s238 + $0x48] sm:$0xff]
        %v285 = vld [vmem:[%s238 + $0x50] sm:$0xff]
        %v286 = vld [vmem:[%s238 + $0x58] sm:$0xff]
        %v287 = vld [vmem:[%s238 + $0x60] sm:$0xff]
        %v288 = vld [vmem:[%s238 + $0x68] sm:$0xff]
        %v289 = vld [vmem:[%s238 + $0x70] sm:$0xff]
        %v290 = vld [vmem:[%s238 + $0x78] sm:$0xff]
        %v291 = vld [vmem:[%s238 + $0x80] sm:$0xff]
        %v292 = vld [vmem:[%s238 + $0x88] sm:$0xff]
        %v293 = vld [vmem:[%s238 + $0x90] sm:$0xff]
        %v294 = vld [vmem:[%s238 + $0x98] sm:$0xff]
        %v295 = vld [vmem:[%s238 + $0xa0] sm:$0xff]
        %v296 = vld [vmem:[%s238 + $0xa8] sm:$0xff]
        %v297 = vld [vmem:[%s238 + $0xb0] sm:$0xff]
        %v298 = vld [vmem:[%s238 + $0xb8] sm:$0xff]
        %v299 = vld [vmem:[%s238 + $0xc0] sm:$0xff]
        %v300 = vld [vmem:[%s238 + $0xc8] sm:$0xff]
        %v301 = vld [vmem:[%s238 + $0xd0] sm:$0xff]
        %v302 = vld [vmem:[%s238 + $0xd8] sm:$0xff]
        %v303 = vld [vmem:[%s238 + $0xe0] sm:$0xff]
        %v304 = vld [vmem:[%s238 + $0xe8] sm:$0xff]
        %v305 = vld [vmem:[%s238 + $0xf0] sm:$0xff]
        %v306 = vld [vmem:[%s238 + $0xf8] sm:$0xff]
        %v307 = vld [vmem:[%s238 + $0x100] sm:$0xff]
        %v308 = vld [vmem:[%s238 + $0x108] sm:$0xff]
        %v309 = vld [vmem:[%s238 + $0x110] sm:$0xff]
        %v310 = vld [vmem:[%s238 + $0x118] sm:$0xff]
        %v311 = vld [vmem:[%s238 + $0x120] sm:$0xff]
        %v312 = vld [vmem:[%s238 + $0x128] sm:$0xff]
        %v313 = vld [vmem:[%s238 + $0x130] sm:$0xff]
        %v314 = vld [vmem:[%s238 + $0x138] sm:$0xff]
        %v315 = vld [vmem:[%s238 + $0x140] sm:$0xff]
        %v316 = vld [vmem:[%s238 + $0x148] sm:$0xff]
        %v317 = vld [vmem:[%s238 + $0x150] sm:$0xff]
        %v318 = vld [vmem:[%s238 + $0x158] sm:$0xff]
        %v319 = vld [vmem:[%s238 + $0x160] sm:$0xff]
        %v320 = vld [vmem:[%s238 + $0x168] sm:$0xff]
        %v321 = vld [vmem:[%s238 + $0x170] sm:$0xff]
        %v322 = vld [vmem:[%s238 + $0x178] sm:$0xff]
        %v323 = vld [vmem:[%s238 + $0x180] sm:$0xff]
        %v324 = vld [vmem:[%s238 + $0x188] sm:$0xff]
        %v325 = vld [vmem:[%s238 + $0x190] sm:$0xff]
        %v326 = vld [vmem:[%s238 + $0x198] sm:$0xff]
        %v327 = vld [vmem:[%s238 + $0x1a0] sm:$0xff]
        %v328 = vld [vmem:[%s238 + $0x1a8] sm:$0xff]
        %v329 = vld [vmem:[%s238 + $0x1b0] sm:$0xff]
        %v330 = vld [vmem:[%s238 + $0x1b8] sm:$0xff]
        %v331 = vld [vmem:[%s238 + $0x1c0] sm:$0xff]
        %v332 = vld [vmem:[%s238 + $0x1c8] sm:$0xff]
        %v333 = vld [vmem:[%s238 + $0x1d0] sm:$0xff]
        %v334 = vld [vmem:[%s238 + $0x1d8] sm:$0xff]
        %v335 = vld [vmem:[%s238 + $0x1e0] sm:$0xff]
        %v336 = vld [vmem:[%s238 + $0x1e8] sm:$0xff]
        %v337 = vld [vmem:[%s238 + $0x1f0] sm:$0xff]
        %v338 = vld [vmem:[%s238 + $0x1f8] sm:$0xff]
        %v339 = vld [vmem:[%s238 + $0x200] sm:$0xff]
        %v340 = vld [vmem:[%s238 + $0x208] sm:$0xff]
        %v341 = vld [vmem:[%s238 + $0x210] sm:$0xff]
        %v342 = vld [vmem:[%s238 + $0x218] sm:$0xff]
        %v343 = vld [vmem:[%s238 + $0x220] sm:$0xff]
        %v344 = vld [vmem:[%s238 + $0x228] sm:$0xff]
        %v345 = vld [vmem:[%s238 + $0x230] sm:$0xff]
        %v346 = vld [vmem:[%s238 + $0x238] sm:$0xff]
        %v347 = vld [vmem:[%s238 + $0x240] sm:$0xff]
        %v348 = vld [vmem:[%s238 + $0x248] sm:$0xff]
        %v349 = vld [vmem:[%s238 + $0x250] sm:$0xff]
        %v350 = vld [vmem:[%s238 + $0x258] sm:$0xff]
        %v351 = vld [vmem:[%s238 + $0x260] sm:$0xff]
        %v352 = vld [vmem:[%s238 + $0x268] sm:$0xff]
        %v353 = vld [vmem:[%s238 + $0x270] sm:$0xff]
        %v354 = vld [vmem:[%s238 + $0x278] sm:$0xff]
        %v355 = vld [vmem:[%s238 + $0x280] sm:$0xff]
        %v356 = vld [vmem:[%s238 + $0x288] sm:$0xff]
        %v357 = vld [vmem:[%s238 + $0x290] sm:$0xff]
        %v358 = vld [vmem:[%s238 + $0x298] sm:$0xff]
        %v359 = vld [vmem:[%s238 + $0x2a0] sm:$0xff]
        %v360 = vld [vmem:[%s238 + $0x2a8] sm:$0xff]
        %v361 = vld [vmem:[%s238 + $0x2b0] sm:$0xff]
        %v362 = vld [vmem:[%s238 + $0x2b8] sm:$0xff]
        %v363 = vld [vmem:[%s238 + $0x2c0] sm:$0xff]
        %v364 = vld [vmem:[%s238 + $0x2c8] sm:$0xff]
        %v365 = vld [vmem:[%s238 + $0x2d0] sm:$0xff]
        %v366 = vld [vmem:[%s238 + $0x2d8] sm:$0xff]
        %v367 = vld [vmem:[%s238 + $0x2e0] sm:$0xff]
        %v368 = vld [vmem:[%s238 + $0x2e8] sm:$0xff]
        %v369 = vld [vmem:[%s238 + $0x2f0] sm:$0xff]
        %v370 = vld [vmem:[%s238 + $0x2f8] sm:$0xff]
        %v371 = vld [vmem:[%s238 + $0x300] sm:$0xff]
        %v372 = vld [vmem:[%s238 + $0x308] sm:$0xff]
        %v373 = vld [vmem:[%s238 + $0x310] sm:$0xff]
        %v374 = vld [vmem:[%s238 + $0x318] sm:$0xff]
        %v375 = vld [vmem:[%s238 + $0x320] sm:$0xff]
        %v376 = vld [vmem:[%s238 + $0x328] sm:$0xff]
        %v377 = vld [vmem:[%s238 + $0x330] sm:$0xff]
        %v378 = vld [vmem:[%s238 + $0x338] sm:$0xff]
        %v379 = vld [vmem:[%s238 + $0x340] sm:$0xff]
        %v380 = vld [vmem:[%s238 + $0x348] sm:$0xff]
        %v381 = vld [vmem:[%s238 + $0x350] sm:$0xff]
        %v382 = vld [vmem:[%s238 + $0x358] sm:$0xff]
        %v383 = vld [vmem:[%s238 + $0x360] sm:$0xff]
        %v384 = vld [vmem:[%s238 + $0x368] sm:$0xff]
        %v385 = vld [vmem:[%s238 + $0x370] sm:$0xff]
        %v386 = vld [vmem:[%s238 + $0x378] sm:$0xff]
        %v387 = vld [vmem:[%s238 + $0x380] sm:$0xff]
        %v388 = vld [vmem:[%s238 + $0x388] sm:$0xff]
        %v389 = vld [vmem:[%s238 + $0x390] sm:$0xff]
        %v390 = vld [vmem:[%s238 + $0x398] sm:$0xff]
        %v391 = vld [vmem:[%s238 + $0x3a0] sm:$0xff]
        %v392 = vld [vmem:[%s238 + $0x3a8] sm:$0xff]
        %v393 = vld [vmem:[%s238 + $0x3b0] sm:$0xff]
        %v394 = vld [vmem:[%s238 + $0x3b8] sm:$0xff]
        %v395 = vld [vmem:[%s238 + $0x3c0] sm:$0xff]
        %v396 = vld [vmem:[%s238 + $0x3c8] sm:$0xff]
        %v397 = vld [vmem:[%s238 + $0x3d0] sm:$0xff]
        %v398 = vld [vmem:[%s238 + $0x3d8] sm:$0xff]
        %v399 = vld [vmem:[%s238 + $0x3e0] sm:$0xff]
        %v400 = vld [vmem:[%s238 + $0x3e8] sm:$0xff]
        %v401 = vld [vmem:[%s238 + $0x3f0] sm:$0xff]
        %v402 = vld [vmem:[%s238 + $0x3f8] sm:$0xff]
        %v403 = vpack.c.bf16 %v279, %v275
        %v404 = vpack.c.bf16 %v280, %v276
        %v405 = vpack.c.bf16 %v281, %v277
        %v406 = vpack.c.bf16 %v282, %v278
        %v407 = vpack.c.bf16 %v287, %v283
        %v408 = vpack.c.bf16 %v288, %v284
        %v409 = vpack.c.bf16 %v289, %v285
        %v410 = vpack.c.bf16 %v290, %v286
        %v411 = vpack.c.bf16 %v295, %v291
        %v412 = vpack.c.bf16 %v296, %v292
        %v413 = vpack.c.bf16 %v297, %v293
        %v414 = vpack.c.bf16 %v298, %v294
        %v415 = vpack.c.bf16 %v303, %v299
        %v416 = vpack.c.bf16 %v304, %v300
        %v417 = vpack.c.bf16 %v305, %v301
        %v418 = vpack.c.bf16 %v306, %v302
        %v419 = vpack.c.bf16 %v311, %v307
        %v420 = vpack.c.bf16 %v312, %v308
        %v421 = vpack.c.bf16 %v313, %v309
        %v422 = vpack.c.bf16 %v314, %v310
        %v423 = vpack.c.bf16 %v319, %v315
        %v424 = vpack.c.bf16 %v320, %v316
        %v425 = vpack.c.bf16 %v321, %v317
        %v426 = vpack.c.bf16 %v322, %v318
        %v427 = vpack.c.bf16 %v327, %v323
        %v428 = vpack.c.bf16 %v328, %v324
        %v429 = vpack.c.bf16 %v329, %v325
        %v430 = vpack.c.bf16 %v330, %v326
        %v431 = vpack.c.bf16 %v335, %v331
        %v432 = vpack.c.bf16 %v336, %v332
        %v433 = vpack.c.bf16 %v337, %v333
        %v434 = vpack.c.bf16 %v338, %v334
        %v435 = vpack.c.bf16 %v343, %v339
        %v436 = vpack.c.bf16 %v344, %v340
        %v437 = vpack.c.bf16 %v345, %v341
        %v438 = vpack.c.bf16 %v346, %v342
        %v439 = vpack.c.bf16 %v351, %v347
        %v440 = vpack.c.bf16 %v352, %v348
        %v441 = vpack.c.bf16 %v353, %v349
        %v442 = vpack.c.bf16 %v354, %v350
        %v443 = vpack.c.bf16 %v359, %v355
        %v444 = vpack.c.bf16 %v360, %v356
        %v445 = vpack.c.bf16 %v361, %v357
        %v446 = vpack.c.bf16 %v362, %v358
        %v447 = vpack.c.bf16 %v367, %v363
        %v448 = vpack.c.bf16 %v368, %v364
        %v449 = vpack.c.bf16 %v369, %v365
        %v450 = vpack.c.bf16 %v370, %v366
        %v451 = vpack.c.bf16 %v375, %v371
        %v452 = vpack.c.bf16 %v376, %v372
        %v453 = vpack.c.bf16 %v377, %v373
        %v454 = vpack.c.bf16 %v378, %v374
        %v455 = vpack.c.bf16 %v383, %v379
        %v456 = vpack.c.bf16 %v384, %v380
        %v457 = vpack.c.bf16 %v385, %v381
        %v458 = vpack.c.bf16 %v386, %v382
        %v459 = vpack.c.bf16 %v391, %v387
        %v460 = vpack.c.bf16 %v392, %v388
        %v461 = vpack.c.bf16 %v393, %v389
        %v462 = vpack.c.bf16 %v394, %v390
        %v463 = vpack.c.bf16 %v399, %v395
        %v464 = vpack.c.bf16 %v400, %v396
        %v465 = vpack.c.bf16 %v401, %v397
        %v466 = vpack.c.bf16 %v402, %v398
        %v467 = vld [vmem:[#allocation5] sm:$0xff]
        %v468 = vld [vmem:[#allocation5 + $0x8] sm:$0xff]
        %v469 = vld [vmem:[#allocation5 + $0x10] sm:$0xff]
        %v470 = vld [vmem:[#allocation5 + $0x18] sm:$0xff]
        %v471 = vld [vmem:[#allocation5 + $0x20] sm:$0xff]
        %v472 = vld [vmem:[#allocation5 + $0x28] sm:$0xff]
        %v473 = vld [vmem:[#allocation5 + $0x30] sm:$0xff]
        %v474 = vld [vmem:[#allocation5 + $0x38] sm:$0xff]
        %v475 = vld [vmem:[#allocation5 + $0x40] sm:$0xff]
        %v476 = vld [vmem:[#allocation5 + $0x48] sm:$0xff]
        %v477 = vld [vmem:[#allocation5 + $0x50] sm:$0xff]
        %v478 = vld [vmem:[#allocation5 + $0x58] sm:$0xff]
        %v479 = vld [vmem:[#allocation5 + $0x60] sm:$0xff]
        %v480 = vld [vmem:[#allocation5 + $0x68] sm:$0xff]
        %v481 = vld [vmem:[#allocation5 + $0x70] sm:$0xff]
        %v482 = vld [vmem:[#allocation5 + $0x78] sm:$0xff]
        %v483 = vld [vmem:[#allocation5 + $0x80] sm:$0xff]
        %v484 = vld [vmem:[#allocation5 + $0x88] sm:$0xff]
        %v485 = vld [vmem:[#allocation5 + $0x90] sm:$0xff]
        %v486 = vld [vmem:[#allocation5 + $0x98] sm:$0xff]
        %v487 = vld [vmem:[#allocation5 + $0xa0] sm:$0xff]
        %v488 = vld [vmem:[#allocation5 + $0xa8] sm:$0xff]
        %v489 = vld [vmem:[#allocation5 + $0xb0] sm:$0xff]
        %v490 = vld [vmem:[#allocation5 + $0xb8] sm:$0xff]
        %v491 = vld [vmem:[#allocation5 + $0xc0] sm:$0xff]
        %v492 = vld [vmem:[#allocation5 + $0xc8] sm:$0xff]
        %v493 = vld [vmem:[#allocation5 + $0xd0] sm:$0xff]
        %v494 = vld [vmem:[#allocation5 + $0xd8] sm:$0xff]
        %v495 = vld [vmem:[#allocation5 + $0xe0] sm:$0xff]
        %v496 = vld [vmem:[#allocation5 + $0xe8] sm:$0xff]
        %v497 = vld [vmem:[#allocation5 + $0xf0] sm:$0xff]
        %v498 = vld [vmem:[#allocation5 + $0xf8] sm:$0xff]
        %v499 = vld [vmem:[#allocation5 + $0x100] sm:$0xff]
        %v500 = vld [vmem:[#allocation5 + $0x108] sm:$0xff]
        %v501 = vld [vmem:[#allocation5 + $0x110] sm:$0xff]
        %v502 = vld [vmem:[#allocation5 + $0x118] sm:$0xff]
        %v503 = vld [vmem:[#allocation5 + $0x120] sm:$0xff]
        %v504 = vld [vmem:[#allocation5 + $0x128] sm:$0xff]
        %v505 = vld [vmem:[#allocation5 + $0x130] sm:$0xff]
        %v506 = vld [vmem:[#allocation5 + $0x138] sm:$0xff]
        %v507 = vld [vmem:[#allocation5 + $0x140] sm:$0xff]
        %v508 = vld [vmem:[#allocation5 + $0x148] sm:$0xff]
        %v509 = vld [vmem:[#allocation5 + $0x150] sm:$0xff]
        %v510 = vld [vmem:[#allocation5 + $0x158] sm:$0xff]
        %v511 = vld [vmem:[#allocation5 + $0x160] sm:$0xff]
        %v512 = vld [vmem:[#allocation5 + $0x168] sm:$0xff]
        %v513 = vld [vmem:[#allocation5 + $0x170] sm:$0xff]
        %v514 = vld [vmem:[#allocation5 + $0x178] sm:$0xff]
        %v515 = vld [vmem:[#allocation5 + $0x180] sm:$0xff]
        %v516 = vld [vmem:[#allocation5 + $0x188] sm:$0xff]
        %v517 = vld [vmem:[#allocation5 + $0x190] sm:$0xff]
        %v518 = vld [vmem:[#allocation5 + $0x198] sm:$0xff]
        %v519 = vld [vmem:[#allocation5 + $0x1a0] sm:$0xff]
        %v520 = vld [vmem:[#allocation5 + $0x1a8] sm:$0xff]
        %v521 = vld [vmem:[#allocation5 + $0x1b0] sm:$0xff]
        %v522 = vld [vmem:[#allocation5 + $0x1b8] sm:$0xff]
        %v523 = vld [vmem:[#allocation5 + $0x1c0] sm:$0xff]
        %v524 = vld [vmem:[#allocation5 + $0x1c8] sm:$0xff]
        %v525 = vld [vmem:[#allocation5 + $0x1d0] sm:$0xff]
        %v526 = vld [vmem:[#allocation5 + $0x1d8] sm:$0xff]
        %v527 = vld [vmem:[#allocation5 + $0x1e0] sm:$0xff]
        %v528 = vld [vmem:[#allocation5 + $0x1e8] sm:$0xff]
        %v529 = vld [vmem:[#allocation5 + $0x1f0] sm:$0xff]
        %v530 = vld [vmem:[#allocation5 + $0x1f8] sm:$0xff]
        %v531 = vld [vmem:[%s2] sm:$0x3]
        %v533 = vlaneseq
        %v534 = vshrl.u32 %v533, 7
        %v535 = vsub.s32 0, %v534
        %v536 = vrot.slane %v531, %v535
        %v537 = vlaneseq
        %v538 = vshrl.u32 %v537, 7
        %v539 = vsub.s32 1, %v538
        %v540 = vrot.slane %v531, %v539
        %v607 = vunpack.c.l.b16 %v467
        %v608 = vunpack.c.h.b16 %v467
        %v609 = vunpack.c.l.b16 %v468
        %v610 = vunpack.c.h.b16 %v468
        %v611 = vunpack.c.l.b16 %v469
        %v612 = vunpack.c.h.b16 %v469
        %v613 = vunpack.c.l.b16 %v470
        %v614 = vunpack.c.h.b16 %v470
        %v615 = vunpack.c.l.b16 %v471
        %v616 = vunpack.c.h.b16 %v471
        %v617 = vunpack.c.l.b16 %v472
        %v618 = vunpack.c.h.b16 %v472
        %v619 = vunpack.c.l.b16 %v473
        %v620 = vunpack.c.h.b16 %v473
        %v621 = vunpack.c.l.b16 %v474
        %v622 = vunpack.c.h.b16 %v474
        %v623 = vunpack.c.l.b16 %v475
        %v624 = vunpack.c.h.b16 %v475
        %v625 = vunpack.c.l.b16 %v476
        %v626 = vunpack.c.h.b16 %v476
        %v627 = vunpack.c.l.b16 %v477
        %v628 = vunpack.c.h.b16 %v477
        %v629 = vunpack.c.l.b16 %v478
        %v630 = vunpack.c.h.b16 %v478
        %v631 = vunpack.c.l.b16 %v479
        %v632 = vunpack.c.h.b16 %v479
        %v633 = vunpack.c.l.b16 %v480
        %v634 = vunpack.c.h.b16 %v480
        %v635 = vunpack.c.l.b16 %v481
        %v636 = vunpack.c.h.b16 %v481
        %v637 = vunpack.c.l.b16 %v482
        %v638 = vunpack.c.h.b16 %v482
        %v639 = vunpack.c.l.b16 %v483
        %v640 = vunpack.c.h.b16 %v483
        %v641 = vunpack.c.l.b16 %v484
        %v642 = vunpack.c.h.b16 %v484
        %v643 = vunpack.c.l.b16 %v485
        %v644 = vunpack.c.h.b16 %v485
        %v645 = vunpack.c.l.b16 %v486
        %v646 = vunpack.c.h.b16 %v486
        %v647 = vunpack.c.l.b16 %v487
        %v648 = vunpack.c.h.b16 %v487
        %v649 = vunpack.c.l.b16 %v488
        %v650 = vunpack.c.h.b16 %v488
        %v651 = vunpack.c.l.b16 %v489
        %v652 = vunpack.c.h.b16 %v489
        %v653 = vunpack.c.l.b16 %v490
        %v654 = vunpack.c.h.b16 %v490
        %v655 = vunpack.c.l.b16 %v491
        %v656 = vunpack.c.h.b16 %v491
        %v657 = vunpack.c.l.b16 %v492
        %v658 = vunpack.c.h.b16 %v492
        %v659 = vunpack.c.l.b16 %v493
        %v660 = vunpack.c.h.b16 %v493
        %v661 = vunpack.c.l.b16 %v494
        %v662 = vunpack.c.h.b16 %v494
        %v663 = vunpack.c.l.b16 %v495
        %v664 = vunpack.c.h.b16 %v495
        %v665 = vunpack.c.l.b16 %v496
        %v666 = vunpack.c.h.b16 %v496
        %v667 = vunpack.c.l.b16 %v497
        %v668 = vunpack.c.h.b16 %v497
        %v669 = vunpack.c.l.b16 %v498
        %v670 = vunpack.c.h.b16 %v498
        %v671 = vunpack.c.l.b16 %v499
        %v672 = vunpack.c.h.b16 %v499
        %v673 = vunpack.c.l.b16 %v500
        %v674 = vunpack.c.h.b16 %v500
        %v675 = vunpack.c.l.b16 %v501
        %v676 = vunpack.c.h.b16 %v501
        %v677 = vunpack.c.l.b16 %v502
        %v678 = vunpack.c.h.b16 %v502
        %v679 = vunpack.c.l.b16 %v503
        %v680 = vunpack.c.h.b16 %v503
        %v681 = vunpack.c.l.b16 %v504
        %v682 = vunpack.c.h.b16 %v504
        %v683 = vunpack.c.l.b16 %v505
        %v684 = vunpack.c.h.b16 %v505
        %v685 = vunpack.c.l.b16 %v506
        %v686 = vunpack.c.h.b16 %v506
        %v687 = vunpack.c.l.b16 %v507
        %v688 = vunpack.c.h.b16 %v507
        %v689 = vunpack.c.l.b16 %v508
        %v690 = vunpack.c.h.b16 %v508
        %v691 = vunpack.c.l.b16 %v509
        %v692 = vunpack.c.h.b16 %v509
        %v693 = vunpack.c.l.b16 %v510
        %v694 = vunpack.c.h.b16 %v510
        %v695 = vunpack.c.l.b16 %v511
        %v696 = vunpack.c.h.b16 %v511
        %v697 = vunpack.c.l.b16 %v512
        %v698 = vunpack.c.h.b16 %v512
        %v699 = vunpack.c.l.b16 %v513
        %v700 = vunpack.c.h.b16 %v513
        %v701 = vunpack.c.l.b16 %v514
        %v702 = vunpack.c.h.b16 %v514
        %v703 = vunpack.c.l.b16 %v515
        %v704 = vunpack.c.h.b16 %v515
        %v705 = vunpack.c.l.b16 %v516
        %v706 = vunpack.c.h.b16 %v516
        %v707 = vunpack.c.l.b16 %v517
        %v708 = vunpack.c.h.b16 %v517
        %v709 = vunpack.c.l.b16 %v518
        %v710 = vunpack.c.h.b16 %v518
        %v711 = vunpack.c.l.b16 %v519
        %v712 = vunpack.c.h.b16 %v519
        %v713 = vunpack.c.l.b16 %v520
        %v714 = vunpack.c.h.b16 %v520
        %v715 = vunpack.c.l.b16 %v521
        %v716 = vunpack.c.h.b16 %v521
        %v717 = vunpack.c.l.b16 %v522
        %v718 = vunpack.c.h.b16 %v522
        %v719 = vunpack.c.l.b16 %v523
        %v720 = vunpack.c.h.b16 %v523
        %v721 = vunpack.c.l.b16 %v524
        %v722 = vunpack.c.h.b16 %v524
        %v723 = vunpack.c.l.b16 %v525
        %v724 = vunpack.c.h.b16 %v525
        %v725 = vunpack.c.l.b16 %v526
        %v726 = vunpack.c.h.b16 %v526
        %v727 = vunpack.c.l.b16 %v527
        %v728 = vunpack.c.h.b16 %v527
        %v729 = vunpack.c.l.b16 %v528
        %v730 = vunpack.c.h.b16 %v528
        %v731 = vunpack.c.l.b16 %v529
        %v732 = vunpack.c.h.b16 %v529
        %v733 = vunpack.c.l.b16 %v530
        %v734 = vunpack.c.h.b16 %v530
        %v735 = vpack.c.b16 %v609, %v607
        %v736 = vpack.c.b16 %v610, %v608
        %v737 = vpack.c.b16 %v613, %v611
        %v738 = vpack.c.b16 %v614, %v612
        %v739 = vpack.c.b16 %v617, %v615
        %v740 = vpack.c.b16 %v618, %v616
        %v741 = vpack.c.b16 %v621, %v619
        %v742 = vpack.c.b16 %v622, %v620
        %v743 = vpack.c.b16 %v625, %v623
        %v744 = vpack.c.b16 %v626, %v624
        %v745 = vpack.c.b16 %v629, %v627
        %v746 = vpack.c.b16 %v630, %v628
        %v747 = vpack.c.b16 %v633, %v631
        %v748 = vpack.c.b16 %v634, %v632
        %v749 = vpack.c.b16 %v637, %v635
        %v750 = vpack.c.b16 %v638, %v636
        %v751 = vpack.c.b16 %v641, %v639
        %v752 = vpack.c.b16 %v642, %v640
        %v753 = vpack.c.b16 %v645, %v643
        %v754 = vpack.c.b16 %v646, %v644
        %v755 = vpack.c.b16 %v649, %v647
        %v756 = vpack.c.b16 %v650, %v648
        %v757 = vpack.c.b16 %v653, %v651
        %v758 = vpack.c.b16 %v654, %v652
        %v759 = vpack.c.b16 %v657, %v655
        %v760 = vpack.c.b16 %v658, %v656
        %v761 = vpack.c.b16 %v661, %v659
        %v762 = vpack.c.b16 %v662, %v660
        %v763 = vpack.c.b16 %v665, %v663
        %v764 = vpack.c.b16 %v666, %v664
        %v765 = vpack.c.b16 %v669, %v667
        %v766 = vpack.c.b16 %v670, %v668
        %v767 = vpack.c.b16 %v673, %v671
        %v768 = vpack.c.b16 %v674, %v672
        %v769 = vpack.c.b16 %v677, %v675
        %v770 = vpack.c.b16 %v678, %v676
        %v771 = vpack.c.b16 %v681, %v679
        %v772 = vpack.c.b16 %v682, %v680
        %v773 = vpack.c.b16 %v685, %v683
        %v774 = vpack.c.b16 %v686, %v684
        %v775 = vpack.c.b16 %v689, %v687
        %v776 = vpack.c.b16 %v690, %v688
        %v777 = vpack.c.b16 %v693, %v691
        %v778 = vpack.c.b16 %v694, %v692
        %v779 = vpack.c.b16 %v697, %v695
        %v780 = vpack.c.b16 %v698, %v696
        %v781 = vpack.c.b16 %v701, %v699
        %v782 = vpack.c.b16 %v702, %v700
        %v783 = vpack.c.b16 %v705, %v703
        %v784 = vpack.c.b16 %v706, %v704
        %v785 = vpack.c.b16 %v709, %v707
        %v786 = vpack.c.b16 %v710, %v708
        %v787 = vpack.c.b16 %v713, %v711
        %v788 = vpack.c.b16 %v714, %v712
        %v789 = vpack.c.b16 %v717, %v715
        %v790 = vpack.c.b16 %v718, %v716
        %v791 = vpack.c.b16 %v721, %v719
        %v792 = vpack.c.b16 %v722, %v720
        %v793 = vpack.c.b16 %v725, %v723
        %v794 = vpack.c.b16 %v726, %v724
        %v795 = vpack.c.b16 %v729, %v727
        %v796 = vpack.c.b16 %v730, %v728
        %v797 = vpack.c.b16 %v733, %v731
        %v798 = vpack.c.b16 %v734, %v732
        %863 = vmatprep.subr.bf16.mxu0 %v736
        %864 = vmatpush1.bf16.msra.mxu0 %v735
        %865 = vmatprep.subr.bf16.mxu0 %v738
        %866 = vmatpush1.bf16.msra.mxu0 %v737
        %867 = vmatprep.subr.bf16.mxu0 %v740
        %868 = vmatpush1.bf16.msra.mxu0 %v739
        %869 = vmatprep.subr.bf16.mxu0 %v742
        %870 = vmatpush1.bf16.msra.mxu0 %v741
        %871 = vmatprep.subr.bf16.mxu0 %v744
        %872 = vmatpush1.bf16.msra.mxu0 %v743
        %873 = vmatprep.subr.bf16.mxu0 %v746
        %874 = vmatpush1.bf16.msra.mxu0 %v745
        %875 = vmatprep.subr.bf16.mxu0 %v748
        %876 = vmatpush1.bf16.msra.mxu0 %v747
        %877 = vmatprep.subr.bf16.mxu0 %v750
        %878 = vmatpush1.bf16.msra.mxu0 %v749
        %879 = vmatprep.subr.bf16.mxu0 %v752
        %880 = vmatpush1.bf16.msra.mxu0 %v751
        %881 = vmatprep.subr.bf16.mxu0 %v754
        %882 = vmatpush1.bf16.msra.mxu0 %v753
        %883 = vmatprep.subr.bf16.mxu0 %v756
        %884 = vmatpush1.bf16.msra.mxu0 %v755
        %885 = vmatprep.subr.bf16.mxu0 %v758
        %886 = vmatpush1.bf16.msra.mxu0 %v757
        %887 = vmatprep.subr.bf16.mxu0 %v760
        %888 = vmatpush1.bf16.msra.mxu0 %v759
        %889 = vmatprep.subr.bf16.mxu0 %v762
        %890 = vmatpush1.bf16.msra.mxu0 %v761
        %891 = vmatprep.subr.bf16.mxu0 %v764
        %892 = vmatpush1.bf16.msra.mxu0 %v763
        %893 = vmatprep.subr.bf16.mxu0 %v766
        %894 = vmatpush1.bf16.msra.mxu0 %v765
        %895 = vmatprep.mubr.bf16.mxu0 %v404
        %896 = vmatmul.mubr.bf16.gmra.mrb[0].mxu0 %v403
        %v897 = vpop.f32.mrb[0].mxu0
        %v898 = vadd.f32 %v536, %v897
        %v899 = vpop.f32.mrb[0].mxu0
        %v900 = vadd.f32 %v540, %v899
        %v901 = vpop.f32.mrb[0].mxu0
        %v902 = vadd.f32 %v536, %v901
        %v903 = vpop.f32.mrb[0].mxu0
        %v904 = vadd.f32 %v540, %v903
        %905 = vmatprep.mubr.bf16.mxu0 %v408
        %906 = vmatmul.mubr.bf16.gmra.mrb[0].mxu0 %v407
        %v907 = vpop.f32.mrb[0].mxu0
        %v908 = vadd.f32 %v536, %v907
        %v909 = vpop.f32.mrb[0].mxu0
        %v910 = vadd.f32 %v540, %v909
        %v911 = vpop.f32.mrb[0].mxu0
        %v912 = vadd.f32 %v536, %v911
        %v913 = vpop.f32.mrb[0].mxu0
        %v914 = vadd.f32 %v540, %v913
        %915 = vmatprep.mubr.bf16.mxu0 %v412
        %916 = vmatmul.mubr.bf16.gmra.mrb[0].mxu0 %v411
        %v917 = vpop.f32.mrb[0].mxu0
        %v918 = vadd.f32 %v536, %v917
        %v919 = vpop.f32.mrb[0].mxu0
        %v920 = vadd.f32 %v540, %v919
        %v921 = vpop.f32.mrb[0].mxu0
        %v922 = vadd.f32 %v536, %v921
        %v923 = vpop.f32.mrb[0].mxu0
        %v924 = vadd.f32 %v540, %v923
        %925 = vmatprep.mubr.bf16.mxu0 %v416
        %926 = vmatmul.mubr.bf16.gmra.mrb[0].mxu0 %v415
        %v927 = vpop.f32.mrb[0].mxu0
        %v928 = vadd.f32 %v536, %v927
        %v929 = vpop.f32.mrb[0].mxu0
        %v930 = vadd.f32 %v540, %v929
        %v931 = vpop.f32.mrb[0].mxu0
        %v932 = vadd.f32 %v536, %v931
        %v933 = vpop.f32.mrb[0].mxu0
        %v934 = vadd.f32 %v540, %v933
        %935 = vmatprep.mubr.bf16.mxu0 %v420
        %936 = vmatmul.mubr.bf16.gmra.mrb[0].mxu0 %v419
        %v937 = vpop.f32.mrb[0].mxu0
        %v938 = vadd.f32 %v536, %v937
        %v939 = vpop.f32.mrb[0].mxu0
        %v940 = vadd.f32 %v540, %v939
        %v941 = vpop.f32.mrb[0].mxu0
        %v942 = vadd.f32 %v536, %v941
        %v943 = vpop.f32.mrb[0].mxu0
        %v944 = vadd.f32 %v540, %v943
        %945 = vmatprep.mubr.bf16.mxu0 %v424
        %946 = vmatmul.mubr.bf16.gmra.mrb[0].mxu0 %v423
        %v947 = vpop.f32.mrb[0].mxu0
        %v948 = vadd.f32 %v536, %v947
        %v949 = vpop.f32.mrb[0].mxu0
        %v950 = vadd.f32 %v540, %v949
        %v951 = vpop.f32.mrb[0].mxu0
        %v952 = vadd.f32 %v536, %v951
        %v953 = vpop.f32.mrb[0].mxu0
        %v954 = vadd.f32 %v540, %v953
        %955 = vmatprep.mubr.bf16.mxu0 %v428
        %956 = vmatmul.mubr.bf16.gmra.mrb[0].mxu0 %v427
        %v957 = vpop.f32.mrb[0].mxu0
        %v958 = vadd.f32 %v536, %v957
        %v959 = vpop.f32.mrb[0].mxu0
        %v960 = vadd.f32 %v540, %v959
        %v961 = vpop.f32.mrb[0].mxu0
        %v962 = vadd.f32 %v536, %v961
        %v963 = vpop.f32.mrb[0].mxu0
        %v964 = vadd.f32 %v540, %v963
        %965 = vmatprep.mubr.bf16.mxu0 %v432
        %966 = vmatmul.mubr.bf16.gmra.mrb[0].mxu0 %v431
        %v967 = vpop.f32.mrb[0].mxu0
        %v968 = vadd.f32 %v536, %v967
        %v969 = vpop.f32.mrb[0].mxu0
        %v970 = vadd.f32 %v540, %v969
        %v971 = vpop.f32.mrb[0].mxu0
        %v972 = vadd.f32 %v536, %v971
        %v973 = vpop.f32.mrb[0].mxu0
        %v974 = vadd.f32 %v540, %v973
        %975 = vmatprep.mubr.bf16.mxu0 %v436
        %976 = vmatmul.mubr.bf16.gmra.mrb[0].mxu0 %v435
        %v977 = vpop.f32.mrb[0].mxu0
        %v978 = vadd.f32 %v536, %v977
        %v979 = vpop.f32.mrb[0].mxu0
        %v980 = vadd.f32 %v540, %v979
        %v981 = vpop.f32.mrb[0].mxu0
        %v982 = vadd.f32 %v536, %v981
        %v983 = vpop.f32.mrb[0].mxu0
        %v984 = vadd.f32 %v540, %v983
        %985 = vmatprep.mubr.bf16.mxu0 %v440
        %986 = vmatmul.mubr.bf16.gmra.mrb[0].mxu0 %v439
        %v987 = vpop.f32.mrb[0].mxu0
        %v988 = vadd.f32 %v536, %v987
        %v989 = vpop.f32.mrb[0].mxu0
        %v990 = vadd.f32 %v540, %v989
        %v991 = vpop.f32.mrb[0].mxu0
        %v992 = vadd.f32 %v536, %v991
        %v993 = vpop.f32.mrb[0].mxu0
        %v994 = vadd.f32 %v540, %v993
        %995 = vmatprep.mubr.bf16.mxu0 %v444
        %996 = vmatmul.mubr.bf16.gmra.mrb[0].mxu0 %v443
        %v997 = vpop.f32.mrb[0].mxu0
        %v998 = vadd.f32 %v536, %v997
        %v999 = vpop.f32.mrb[0].mxu0
        %v1000 = vadd.f32 %v540, %v999
        %v1001 = vpop.f32.mrb[0].mxu0
        %v1002 = vadd.f32 %v536, %v1001
        %v1003 = vpop.f32.mrb[0].mxu0
        %v1004 = vadd.f32 %v540, %v1003
        %1005 = vmatprep.mubr.bf16.mxu0 %v448
        %1006 = vmatmul.mubr.bf16.gmra.mrb[0].mxu0 %v447
        %v1007 = vpop.f32.mrb[0].mxu0
        %v1008 = vadd.f32 %v536, %v1007
        %v1009 = vpop.f32.mrb[0].mxu0
        %v1010 = vadd.f32 %v540, %v1009
        %v1011 = vpop.f32.mrb[0].mxu0
        %v1012 = vadd.f32 %v536, %v1011
        %v1013 = vpop.f32.mrb[0].mxu0
        %v1014 = vadd.f32 %v540, %v1013
        %1015 = vmatprep.mubr.bf16.mxu0 %v452
        %1016 = vmatmul.mubr.bf16.gmra.mrb[0].mxu0 %v451
        %v1017 = vpop.f32.mrb[0].mxu0
        %v1018 = vadd.f32 %v536, %v1017
        %v1019 = vpop.f32.mrb[0].mxu0
        %v1020 = vadd.f32 %v540, %v1019
        %v1021 = vpop.f32.mrb[0].mxu0
        %v1022 = vadd.f32 %v536, %v1021
        %v1023 = vpop.f32.mrb[0].mxu0
        %v1024 = vadd.f32 %v540, %v1023
        %1025 = vmatprep.mubr.bf16.mxu0 %v456
        %1026 = vmatmul.mubr.bf16.gmra.mrb[0].mxu0 %v455
        %v1027 = vpop.f32.mrb[0].mxu0
        %v1028 = vadd.f32 %v536, %v1027
        %v1029 = vpop.f32.mrb[0].mxu0
        %v1030 = vadd.f32 %v540, %v1029
        %v1031 = vpop.f32.mrb[0].mxu0
        %v1032 = vadd.f32 %v536, %v1031
        %v1033 = vpop.f32.mrb[0].mxu0
        %v1034 = vadd.f32 %v540, %v1033
        %1035 = vmatprep.mubr.bf16.mxu0 %v460
        %1036 = vmatmul.mubr.bf16.gmra.mrb[0].mxu0 %v459
        %v1037 = vpop.f32.mrb[0].mxu0
        %v1038 = vadd.f32 %v536, %v1037
        %v1039 = vpop.f32.mrb[0].mxu0
        %v1040 = vadd.f32 %v540, %v1039
        %v1041 = vpop.f32.mrb[0].mxu0
        %v1042 = vadd.f32 %v536, %v1041
        %v1043 = vpop.f32.mrb[0].mxu0
        %v1044 = vadd.f32 %v540, %v1043
        %1045 = vmatprep.mubr.bf16.mxu0 %v464
        %1046 = vmatmul.mubr.bf16.gmra.mrb[0].mxu0 %v463
        %v1047 = vpop.f32.mrb[0].mxu0
        %v1048 = vadd.f32 %v536, %v1047
        %v1049 = vpop.f32.mrb[0].mxu0
        %v1050 = vadd.f32 %v540, %v1049
        %v1051 = vpop.f32.mrb[0].mxu0
        %v1052 = vadd.f32 %v536, %v1051
        %v1053 = vpop.f32.mrb[0].mxu0
        %v1054 = vadd.f32 %v540, %v1053
        %1055 = vdwg.mxu0
        %1056 = vmatprep.subr.bf16.mxu0 %v768
        %1057 = vmatpush1.bf16.msra.mxu0 %v767
        %1058 = vmatprep.subr.bf16.mxu0 %v770
        %1059 = vmatpush1.bf16.msra.mxu0 %v769
        %1060 = vmatprep.subr.bf16.mxu0 %v772
        %1061 = vmatpush1.bf16.msra.mxu0 %v771
        %1062 = vmatprep.subr.bf16.mxu0 %v774
        %1063 = vmatpush1.bf16.msra.mxu0 %v773
        %1064 = vmatprep.subr.bf16.mxu0 %v776
        %1065 = vmatpush1.bf16.msra.mxu0 %v775
        %1066 = vmatprep.subr.bf16.mxu0 %v778
        %1067 = vmatpush1.bf16.msra.mxu0 %v777
        %1068 = vmatprep.subr.bf16.mxu0 %v780
        %1069 = vmatpush1.bf16.msra.mxu0 %v779
        %1070 = vmatprep.subr.bf16.mxu0 %v782
        %1071 = vmatpush1.bf16.msra.mxu0 %v781
        %1072 = vmatprep.subr.bf16.mxu0 %v784
        %1073 = vmatpush1.bf16.msra.mxu0 %v783
        %1074 = vmatprep.subr.bf16.mxu0 %v786
        %1075 = vmatpush1.bf16.msra.mxu0 %v785
        %1076 = vmatprep.subr.bf16.mxu0 %v788
        %1077 = vmatpush1.bf16.msra.mxu0 %v787
        %1078 = vmatprep.subr.bf16.mxu0 %v790
        %1079 = vmatpush1.bf16.msra.mxu0 %v789
        %1080 = vmatprep.subr.bf16.mxu0 %v792
        %1081 = vmatpush1.bf16.msra.mxu0 %v791
        %1082 = vmatprep.subr.bf16.mxu0 %v794
        %1083 = vmatpush1.bf16.msra.mxu0 %v793
        %1084 = vmatprep.subr.bf16.mxu0 %v796
        %1085 = vmatpush1.bf16.msra.mxu0 %v795
        %1086 = vmatprep.subr.bf16.mxu0 %v798
        %1087 = vmatpush1.bf16.msra.mxu0 %v797
        %1088 = vmatprep.mubr.bf16.mxu0 %v406
        %1089 = vmatmul.mubr.bf16.gmra.mrb[0].mxu0 %v405
        %v1090 = vpop.f32.mrb[0].mxu0
        %v1091 = vadd.f32 %v898, %v1090
        %v1092 = vpop.f32.mrb[0].mxu0
        %v1093 = vadd.f32 %v900, %v1092
        %v1094 = vpop.f32.mrb[0].mxu0
        %v1095 = vadd.f32 %v902, %v1094
        %v1096 = vpop.f32.mrb[0].mxu0
        %v1097 = vadd.f32 %v904, %v1096
        %1098 = vmatprep.mubr.bf16.mxu0 %v410
        %1099 = vmatmul.mubr.bf16.gmra.mrb[0].mxu0 %v409
        %v1100 = vpop.f32.mrb[0].mxu0
        %v1101 = vadd.f32 %v908, %v1100
        %v1102 = vpop.f32.mrb[0].mxu0
        %v1103 = vadd.f32 %v910, %v1102
        %v1104 = vpop.f32.mrb[0].mxu0
        %v1105 = vadd.f32 %v912, %v1104
        %v1106 = vpop.f32.mrb[0].mxu0
        %v1107 = vadd.f32 %v914, %v1106
        %1108 = vmatprep.mubr.bf16.mxu0 %v414
        %1109 = vmatmul.mubr.bf16.gmra.mrb[0].mxu0 %v413
        %v1110 = vpop.f32.mrb[0].mxu0
        %v1111 = vadd.f32 %v918, %v1110
        %v1112 = vpop.f32.mrb[0].mxu0
        %v1113 = vadd.f32 %v920, %v1112
        %v1114 = vpop.f32.mrb[0].mxu0
        %v1115 = vadd.f32 %v922, %v1114
        %v1116 = vpop.f32.mrb[0].mxu0
        %v1117 = vadd.f32 %v924, %v1116
        %1118 = vmatprep.mubr.bf16.mxu0 %v418
        %1119 = vmatmul.mubr.bf16.gmra.mrb[0].mxu0 %v417
        %v1120 = vpop.f32.mrb[0].mxu0
        %v1121 = vadd.f32 %v928, %v1120
        %v1122 = vpop.f32.mrb[0].mxu0
        %v1123 = vadd.f32 %v930, %v1122
        %v1124 = vpop.f32.mrb[0].mxu0
        %v1125 = vadd.f32 %v932, %v1124
        %v1126 = vpop.f32.mrb[0].mxu0
        %v1127 = vadd.f32 %v934, %v1126
        %1128 = vmatprep.mubr.bf16.mxu0 %v422
        %1129 = vmatmul.mubr.bf16.gmra.mrb[0].mxu0 %v421
        %v1130 = vpop.f32.mrb[0].mxu0
        %v1131 = vadd.f32 %v938, %v1130
        %v1132 = vpop.f32.mrb[0].mxu0
        %v1133 = vadd.f32 %v940, %v1132
        %v1134 = vpop.f32.mrb[0].mxu0
        %v1135 = vadd.f32 %v942, %v1134
        %v1136 = vpop.f32.mrb[0].mxu0
        %v1137 = vadd.f32 %v944, %v1136
        %1138 = vmatprep.mubr.bf16.mxu0 %v426
        %1139 = vmatmul.mubr.bf16.gmra.mrb[0].mxu0 %v425
        %v1140 = vpop.f32.mrb[0].mxu0
        %v1141 = vadd.f32 %v948, %v1140
        %v1142 = vpop.f32.mrb[0].mxu0
        %v1143 = vadd.f32 %v950, %v1142
        %v1144 = vpop.f32.mrb[0].mxu0
        %v1145 = vadd.f32 %v952, %v1144
        %v1146 = vpop.f32.mrb[0].mxu0
        %v1147 = vadd.f32 %v954, %v1146
        %1148 = vmatprep.mubr.bf16.mxu0 %v430
        %1149 = vmatmul.mubr.bf16.gmra.mrb[0].mxu0 %v429
        %v1150 = vpop.f32.mrb[0].mxu0
        %v1151 = vadd.f32 %v958, %v1150
        %v1152 = vpop.f32.mrb[0].mxu0
        %v1153 = vadd.f32 %v960, %v1152
        %v1154 = vpop.f32.mrb[0].mxu0
        %v1155 = vadd.f32 %v962, %v1154
        %v1156 = vpop.f32.mrb[0].mxu0
        %v1157 = vadd.f32 %v964, %v1156
        %1158 = vmatprep.mubr.bf16.mxu0 %v434
        %1159 = vmatmul.mubr.bf16.gmra.mrb[0].mxu0 %v433
        %v1160 = vpop.f32.mrb[0].mxu0
        %v1161 = vadd.f32 %v968, %v1160
        %v1162 = vpop.f32.mrb[0].mxu0
        %v1163 = vadd.f32 %v970, %v1162
        %v1164 = vpop.f32.mrb[0].mxu0
        %v1165 = vadd.f32 %v972, %v1164
        %v1166 = vpop.f32.mrb[0].mxu0
        %v1167 = vadd.f32 %v974, %v1166
        %1168 = vmatprep.mubr.bf16.mxu0 %v438
        %1169 = vmatmul.mubr.bf16.gmra.mrb[0].mxu0 %v437
        %v1170 = vpop.f32.mrb[0].mxu0
        %v1171 = vadd.f32 %v978, %v1170
        %v1172 = vpop.f32.mrb[0].mxu0
        %v1173 = vadd.f32 %v980, %v1172
        %v1174 = vpop.f32.mrb[0].mxu0
        %v1175 = vadd.f32 %v982, %v1174
        %v1176 = vpop.f32.mrb[0].mxu0
        %v1177 = vadd.f32 %v984, %v1176
        %1178 = vmatprep.mubr.bf16.mxu0 %v442
        %1179 = vmatmul.mubr.bf16.gmra.mrb[0].mxu0 %v441
        %v1180 = vpop.f32.mrb[0].mxu0
        %v1181 = vadd.f32 %v988, %v1180
        %v1182 = vpop.f32.mrb[0].mxu0
        %v1183 = vadd.f32 %v990, %v1182
        %v1184 = vpop.f32.mrb[0].mxu0
        %v1185 = vadd.f32 %v992, %v1184
        %v1186 = vpop.f32.mrb[0].mxu0
        %v1187 = vadd.f32 %v994, %v1186
        %1188 = vmatprep.mubr.bf16.mxu0 %v446
        %1189 = vmatmul.mubr.bf16.gmra.mrb[0].mxu0 %v445
        %v1190 = vpop.f32.mrb[0].mxu0
        %v1191 = vadd.f32 %v998, %v1190
        %v1192 = vpop.f32.mrb[0].mxu0
        %v1193 = vadd.f32 %v1000, %v1192
        %v1194 = vpop.f32.mrb[0].mxu0
        %v1195 = vadd.f32 %v1002, %v1194
        %v1196 = vpop.f32.mrb[0].mxu0
        %v1197 = vadd.f32 %v1004, %v1196
        %1198 = vmatprep.mubr.bf16.mxu0 %v450
        %1199 = vmatmul.mubr.bf16.gmra.mrb[0].mxu0 %v449
        %v1200 = vpop.f32.mrb[0].mxu0
        %v1201 = vadd.f32 %v1008, %v1200
        %v1202 = vpop.f32.mrb[0].mxu0
        %v1203 = vadd.f32 %v1010, %v1202
        %v1204 = vpop.f32.mrb[0].mxu0
        %v1205 = vadd.f32 %v1012, %v1204
        %v1206 = vpop.f32.mrb[0].mxu0
        %v1207 = vadd.f32 %v1014, %v1206
        %1208 = vmatprep.mubr.bf16.mxu0 %v454
        %1209 = vmatmul.mubr.bf16.gmra.mrb[0].mxu0 %v453
        %v1210 = vpop.f32.mrb[0].mxu0
        %v1211 = vadd.f32 %v1018, %v1210
        %v1212 = vpop.f32.mrb[0].mxu0
        %v1213 = vadd.f32 %v1020, %v1212
        %v1214 = vpop.f32.mrb[0].mxu0
        %v1215 = vadd.f32 %v1022, %v1214
        %v1216 = vpop.f32.mrb[0].mxu0
        %v1217 = vadd.f32 %v1024, %v1216
        %1218 = vmatprep.mubr.bf16.mxu0 %v458
        %1219 = vmatmul.mubr.bf16.gmra.mrb[0].mxu0 %v457
        %v1220 = vpop.f32.mrb[0].mxu0
        %v1221 = vadd.f32 %v1028, %v1220
        %v1222 = vpop.f32.mrb[0].mxu0
        %v1223 = vadd.f32 %v1030, %v1222
        %v1224 = vpop.f32.mrb[0].mxu0
        %v1225 = vadd.f32 %v1032, %v1224
        %v1226 = vpop.f32.mrb[0].mxu0
        %v1227 = vadd.f32 %v1034, %v1226
        %1228 = vmatprep.mubr.bf16.mxu0 %v462
        %1229 = vmatmul.mubr.bf16.gmra.mrb[0].mxu0 %v461
        %v1230 = vpop.f32.mrb[0].mxu0
        %v1231 = vadd.f32 %v1038, %v1230
        %v1232 = vpop.f32.mrb[0].mxu0
        %v1233 = vadd.f32 %v1040, %v1232
        %v1234 = vpop.f32.mrb[0].mxu0
        %v1235 = vadd.f32 %v1042, %v1234
        %v1236 = vpop.f32.mrb[0].mxu0
        %v1237 = vadd.f32 %v1044, %v1236
        %1238 = vmatprep.mubr.bf16.mxu0 %v466
        %1239 = vmatmul.mubr.bf16.gmra.mrb[0].mxu0 %v465
        %v1240 = vpop.f32.mrb[0].mxu0
        %v1241 = vadd.f32 %v1048, %v1240
        %v1242 = vpop.f32.mrb[0].mxu0
        %v1243 = vadd.f32 %v1050, %v1242
        %v1244 = vpop.f32.mrb[0].mxu0
        %v1245 = vadd.f32 %v1052, %v1244
        %v1246 = vpop.f32.mrb[0].mxu0
        %v1247 = vadd.f32 %v1054, %v1246
        %1248 = vdwg.mxu0
        %v1249 = vtanh.pop %v1091
        %v1250 = vtanh.pop %v1093
        %v1251 = vtanh.pop %v1095
        %v1252 = vtanh.pop %v1097
        %v1253 = vtanh.pop %v1101
        %v1254 = vtanh.pop %v1103
        %v1255 = vtanh.pop %v1105
        %v1256 = vtanh.pop %v1107
        %v1257 = vtanh.pop %v1111
        %v1258 = vtanh.pop %v1113
        %v1259 = vtanh.pop %v1115
        %v1260 = vtanh.pop %v1117
        %v1261 = vtanh.pop %v1121
        %v1262 = vtanh.pop %v1123
        %v1263 = vtanh.pop %v1125
        %v1264 = vtanh.pop %v1127
        %v1265 = vtanh.pop %v1131
        %v1266 = vtanh.pop %v1133
        %v1267 = vtanh.pop %v1135
        %v1268 = vtanh.pop %v1137
        %v1269 = vtanh.pop %v1141
        %v1270 = vtanh.pop %v1143
        %v1271 = vtanh.pop %v1145
        %v1272 = vtanh.pop %v1147
        %v1273 = vtanh.pop %v1151
        %v1274 = vtanh.pop %v1153
        %v1275 = vtanh.pop %v1155
        %v1276 = vtanh.pop %v1157
        %v1277 = vtanh.pop %v1161
        %v1278 = vtanh.pop %v1163
        %v1279 = vtanh.pop %v1165
        %v1280 = vtanh.pop %v1167
        %v1281 = vtanh.pop %v1171
        %v1282 = vtanh.pop %v1173
        %v1283 = vtanh.pop %v1175
        %v1284 = vtanh.pop %v1177
        %v1285 = vtanh.pop %v1181
        %v1286 = vtanh.pop %v1183
        %v1287 = vtanh.pop %v1185
        %v1288 = vtanh.pop %v1187
        %v1289 = vtanh.pop %v1191
        %v1290 = vtanh.pop %v1193
        %v1291 = vtanh.pop %v1195
        %v1292 = vtanh.pop %v1197
        %v1293 = vtanh.pop %v1201
        %v1294 = vtanh.pop %v1203
        %v1295 = vtanh.pop %v1205
        %v1296 = vtanh.pop %v1207
        %v1297 = vtanh.pop %v1211
        %v1298 = vtanh.pop %v1213
        %v1299 = vtanh.pop %v1215
        %v1300 = vtanh.pop %v1217
        %v1301 = vtanh.pop %v1221
        %v1302 = vtanh.pop %v1223
        %v1303 = vtanh.pop %v1225
        %v1304 = vtanh.pop %v1227
        %v1305 = vtanh.pop %v1231
        %v1306 = vtanh.pop %v1233
        %v1307 = vtanh.pop %v1235
        %v1308 = vtanh.pop %v1237
        %v1309 = vtanh.pop %v1241
        %v1310 = vtanh.pop %v1243
        %v1311 = vtanh.pop %v1245
        %v1312 = vtanh.pop %v1247
        %v1313 = vpack.c.bf16 %v1251, %v1249
        %v1314 = vpack.c.bf16 %v1252, %v1250
        %v1315 = vpack.c.bf16 %v1255, %v1253
        %v1316 = vpack.c.bf16 %v1256, %v1254
        %v1317 = vpack.c.bf16 %v1259, %v1257
        %v1318 = vpack.c.bf16 %v1260, %v1258
        %v1319 = vpack.c.bf16 %v1263, %v1261
        %v1320 = vpack.c.bf16 %v1264, %v1262
        %v1321 = vpack.c.bf16 %v1267, %v1265
        %v1322 = vpack.c.bf16 %v1268, %v1266
        %v1323 = vpack.c.bf16 %v1271, %v1269
        %v1324 = vpack.c.bf16 %v1272, %v1270
        %v1325 = vpack.c.bf16 %v1275, %v1273
        %v1326 = vpack.c.bf16 %v1276, %v1274
        %v1327 = vpack.c.bf16 %v1279, %v1277
        %v1328 = vpack.c.bf16 %v1280, %v1278
        %v1329 = vpack.c.bf16 %v1283, %v1281
        %v1330 = vpack.c.bf16 %v1284, %v1282
        %v1331 = vpack.c.bf16 %v1287, %v1285
        %v1332 = vpack.c.bf16 %v1288, %v1286
        %v1333 = vpack.c.bf16 %v1291, %v1289
        %v1334 = vpack.c.bf16 %v1292, %v1290
        %v1335 = vpack.c.bf16 %v1295, %v1293
        %v1336 = vpack.c.bf16 %v1296, %v1294
        %v1337 = vpack.c.bf16 %v1299, %v1297
        %v1338 = vpack.c.bf16 %v1300, %v1298
        %v1339 = vpack.c.bf16 %v1303, %v1301
        %v1340 = vpack.c.bf16 %v1304, %v1302
        %v1341 = vpack.c.bf16 %v1307, %v1305
        %v1342 = vpack.c.bf16 %v1308, %v1306
        %v1343 = vpack.c.bf16 %v1311, %v1309
        %v1344 = vpack.c.bf16 %v1312, %v1310
        %v1345 = vld [vmem:[#allocation7] sm:$0xff]
        %v1346 = vld [vmem:[#allocation7 + $0x8] sm:$0xff]
        %v1347 = vld [vmem:[#allocation7 + $0x10] sm:$0xff]
        %v1348 = vld [vmem:[#allocation7 + $0x18] sm:$0xff]
        %v1349 = vld [vmem:[#allocation7 + $0x20] sm:$0xff]
        %v1350 = vld [vmem:[#allocation7 + $0x28] sm:$0xff]
        %v1351 = vld [vmem:[#allocation7 + $0x30] sm:$0xff]
        %v1352 = vld [vmem:[#allocation7 + $0x38] sm:$0xff]
        %v1353 = vld [vmem:[#allocation7 + $0x40] sm:$0xff]
        %v1354 = vld [vmem:[#allocation7 + $0x48] sm:$0xff]
        %v1355 = vld [vmem:[#allocation7 + $0x50] sm:$0xff]
        %v1356 = vld [vmem:[#allocation7 + $0x58] sm:$0xff]
        %v1357 = vld [vmem:[#allocation7 + $0x60] sm:$0xff]
        %v1358 = vld [vmem:[#allocation7 + $0x68] sm:$0xff]
        %v1359 = vld [vmem:[#allocation7 + $0x70] sm:$0xff]
        %v1360 = vld [vmem:[#allocation7 + $0x78] sm:$0xff]
        %v1361 = vld [vmem:[#allocation7 + $0x80] sm:$0xff]
        %v1362 = vld [vmem:[#allocation7 + $0x88] sm:$0xff]
        %v1363 = vld [vmem:[#allocation7 + $0x90] sm:$0xff]
        %v1364 = vld [vmem:[#allocation7 + $0x98] sm:$0xff]
        %v1365 = vld [vmem:[#allocation7 + $0xa0] sm:$0xff]
        %v1366 = vld [vmem:[#allocation7 + $0xa8] sm:$0xff]
        %v1367 = vld [vmem:[#allocation7 + $0xb0] sm:$0xff]
        %v1368 = vld [vmem:[#allocation7 + $0xb8] sm:$0xff]
        %v1369 = vld [vmem:[#allocation7 + $0xc0] sm:$0xff]
        %v1370 = vld [vmem:[#allocation7 + $0xc8] sm:$0xff]
        %v1371 = vld [vmem:[#allocation7 + $0xd0] sm:$0xff]
        %v1372 = vld [vmem:[#allocation7 + $0xd8] sm:$0xff]
        %v1373 = vld [vmem:[#allocation7 + $0xe0] sm:$0xff]
        %v1374 = vld [vmem:[#allocation7 + $0xe8] sm:$0xff]
        %v1375 = vld [vmem:[#allocation7 + $0xf0] sm:$0xff]
        %v1376 = vld [vmem:[#allocation7 + $0xf8] sm:$0xff]
        %v1377 = vld [vmem:[#allocation7 + $0x100] sm:$0xff]
        %v1378 = vld [vmem:[#allocation7 + $0x108] sm:$0xff]
        %v1379 = vld [vmem:[#allocation7 + $0x110] sm:$0xff]
        %v1380 = vld [vmem:[#allocation7 + $0x118] sm:$0xff]
        %v1381 = vld [vmem:[#allocation7 + $0x120] sm:$0xff]
        %v1382 = vld [vmem:[#allocation7 + $0x128] sm:$0xff]
        %v1383 = vld [vmem:[#allocation7 + $0x130] sm:$0xff]
        %v1384 = vld [vmem:[#allocation7 + $0x138] sm:$0xff]
        %v1385 = vld [vmem:[#allocation7 + $0x140] sm:$0xff]
        %v1386 = vld [vmem:[#allocation7 + $0x148] sm:$0xff]
        %v1387 = vld [vmem:[#allocation7 + $0x150] sm:$0xff]
        %v1388 = vld [vmem:[#allocation7 + $0x158] sm:$0xff]
        %v1389 = vld [vmem:[#allocation7 + $0x160] sm:$0xff]
        %v1390 = vld [vmem:[#allocation7 + $0x168] sm:$0xff]
        %v1391 = vld [vmem:[#allocation7 + $0x170] sm:$0xff]
        %v1392 = vld [vmem:[#allocation7 + $0x178] sm:$0xff]
        %v1393 = vld [vmem:[#allocation7 + $0x180] sm:$0xff]
        %v1394 = vld [vmem:[#allocation7 + $0x188] sm:$0xff]
        %v1395 = vld [vmem:[#allocation7 + $0x190] sm:$0xff]
        %v1396 = vld [vmem:[#allocation7 + $0x198] sm:$0xff]
        %v1397 = vld [vmem:[#allocation7 + $0x1a0] sm:$0xff]
        %v1398 = vld [vmem:[#allocation7 + $0x1a8] sm:$0xff]
        %v1399 = vld [vmem:[#allocation7 + $0x1b0] sm:$0xff]
        %v1400 = vld [vmem:[#allocation7 + $0x1b8] sm:$0xff]
        %v1401 = vld [vmem:[#allocation7 + $0x1c0] sm:$0xff]
        %v1402 = vld [vmem:[#allocation7 + $0x1c8] sm:$0xff]
        %v1403 = vld [vmem:[#allocation7 + $0x1d0] sm:$0xff]
        %v1404 = vld [vmem:[#allocation7 + $0x1d8] sm:$0xff]
        %v1405 = vld [vmem:[#allocation7 + $0x1e0] sm:$0xff]
        %v1406 = vld [vmem:[#allocation7 + $0x1e8] sm:$0xff]
        %v1407 = vld [vmem:[#allocation7 + $0x1f0] sm:$0xff]
        %v1408 = vld [vmem:[#allocation7 + $0x1f8] sm:$0xff]
        %v1409 = vld [vmem:[%s4] sm:$0xf]
        %v1411 = vlaneseq
        %v1412 = vshrl.u32 %v1411, 7
        %v1413 = vsub.s32 0, %v1412
        %v1414 = vrot.slane %v1409, %v1413
        %v1415 = vlaneseq
        %v1416 = vshrl.u32 %v1415, 7
        %v1417 = vsub.s32 1, %v1416
        %v1418 = vrot.slane %v1409, %v1417
        %v1419 = vlaneseq
        %v1420 = vshrl.u32 %v1419, 7
        %v1421 = vsub.s32 2, %v1420
        %v1422 = vrot.slane %v1409, %v1421
        %v1423 = vlaneseq
        %v1424 = vshrl.u32 %v1423, 7
        %v1425 = vsub.s32 3, %v1424
        %v1426 = vrot.slane %v1409, %v1425
        %v1495 = vunpack.c.l.b16 %v1345
        %v1496 = vunpack.c.h.b16 %v1345
        %v1497 = vunpack.c.l.b16 %v1346
        %v1498 = vunpack.c.h.b16 %v1346
        %v1499 = vunpack.c.l.b16 %v1347
        %v1500 = vunpack.c.h.b16 %v1347
        %v1501 = vunpack.c.l.b16 %v1348
        %v1502 = vunpack.c.h.b16 %v1348
        %v1503 = vunpack.c.l.b16 %v1349
        %v1504 = vunpack.c.h.b16 %v1349
        %v1505 = vunpack.c.l.b16 %v1350
        %v1506 = vunpack.c.h.b16 %v1350
        %v1507 = vunpack.c.l.b16 %v1351
        %v1508 = vunpack.c.h.b16 %v1351
        %v1509 = vunpack.c.l.b16 %v1352
        %v1510 = vunpack.c.h.b16 %v1352
        %v1511 = vunpack.c.l.b16 %v1353
        %v1512 = vunpack.c.h.b16 %v1353
        %v1513 = vunpack.c.l.b16 %v1354
        %v1514 = vunpack.c.h.b16 %v1354
        %v1515 = vunpack.c.l.b16 %v1355
        %v1516 = vunpack.c.h.b16 %v1355
        %v1517 = vunpack.c.l.b16 %v1356
        %v1518 = vunpack.c.h.b16 %v1356
        %v1519 = vunpack.c.l.b16 %v1357
        %v1520 = vunpack.c.h.b16 %v1357
        %v1521 = vunpack.c.l.b16 %v1358
        %v1522 = vunpack.c.h.b16 %v1358
        %v1523 = vunpack.c.l.b16 %v1359
        %v1524 = vunpack.c.h.b16 %v1359
        %v1525 = vunpack.c.l.b16 %v1360
        %v1526 = vunpack.c.h.b16 %v1360
        %v1527 = vunpack.c.l.b16 %v1361
        %v1528 = vunpack.c.h.b16 %v1361
        %v1529 = vunpack.c.l.b16 %v1362
        %v1530 = vunpack.c.h.b16 %v1362
        %v1531 = vunpack.c.l.b16 %v1363
        %v1532 = vunpack.c.h.b16 %v1363
        %v1533 = vunpack.c.l.b16 %v1364
        %v1534 = vunpack.c.h.b16 %v1364
        %v1535 = vunpack.c.l.b16 %v1365
        %v1536 = vunpack.c.h.b16 %v1365
        %v1537 = vunpack.c.l.b16 %v1366
        %v1538 = vunpack.c.h.b16 %v1366
        %v1539 = vunpack.c.l.b16 %v1367
        %v1540 = vunpack.c.h.b16 %v1367
        %v1541 = vunpack.c.l.b16 %v1368
        %v1542 = vunpack.c.h.b16 %v1368
        %v1543 = vunpack.c.l.b16 %v1369
        %v1544 = vunpack.c.h.b16 %v1369
        %v1545 = vunpack.c.l.b16 %v1370
        %v1546 = vunpack.c.h.b16 %v1370
        %v1547 = vunpack.c.l.b16 %v1371
        %v1548 = vunpack.c.h.b16 %v1371
        %v1549 = vunpack.c.l.b16 %v1372
        %v1550 = vunpack.c.h.b16 %v1372
        %v1551 = vunpack.c.l.b16 %v1373
        %v1552 = vunpack.c.h.b16 %v1373
        %v1553 = vunpack.c.l.b16 %v1374
        %v1554 = vunpack.c.h.b16 %v1374
        %v1555 = vunpack.c.l.b16 %v1375
        %v1556 = vunpack.c.h.b16 %v1375
        %v1557 = vunpack.c.l.b16 %v1376
        %v1558 = vunpack.c.h.b16 %v1376
        %v1559 = vunpack.c.l.b16 %v1377
        %v1560 = vunpack.c.h.b16 %v1377
        %v1561 = vunpack.c.l.b16 %v1378
        %v1562 = vunpack.c.h.b16 %v1378
        %v1563 = vunpack.c.l.b16 %v1379
        %v1564 = vunpack.c.h.b16 %v1379
        %v1565 = vunpack.c.l.b16 %v1380
        %v1566 = vunpack.c.h.b16 %v1380
        %v1567 = vunpack.c.l.b16 %v1381
        %v1568 = vunpack.c.h.b16 %v1381
        %v1569 = vunpack.c.l.b16 %v1382
        %v1570 = vunpack.c.h.b16 %v1382
        %v1571 = vunpack.c.l.b16 %v1383
        %v1572 = vunpack.c.h.b16 %v1383
        %v1573 = vunpack.c.l.b16 %v1384
        %v1574 = vunpack.c.h.b16 %v1384
        %v1575 = vunpack.c.l.b16 %v1385
        %v1576 = vunpack.c.h.b16 %v1385
        %v1577 = vunpack.c.l.b16 %v1386
        %v1578 = vunpack.c.h.b16 %v1386
        %v1579 = vunpack.c.l.b16 %v1387
        %v1580 = vunpack.c.h.b16 %v1387
        %v1581 = vunpack.c.l.b16 %v1388
        %v1582 = vunpack.c.h.b16 %v1388
        %v1583 = vunpack.c.l.b16 %v1389
        %v1584 = vunpack.c.h.b16 %v1389
        %v1585 = vunpack.c.l.b16 %v1390
        %v1586 = vunpack.c.h.b16 %v1390
        %v1587 = vunpack.c.l.b16 %v1391
        %v1588 = vunpack.c.h.b16 %v1391
        %v1589 = vunpack.c.l.b16 %v1392
        %v1590 = vunpack.c.h.b16 %v1392
        %v1591 = vunpack.c.l.b16 %v1393
        %v1592 = vunpack.c.h.b16 %v1393
        %v1593 = vunpack.c.l.b16 %v1394
        %v1594 = vunpack.c.h.b16 %v1394
        %v1595 = vunpack.c.l.b16 %v1395
        %v1596 = vunpack.c.h.b16 %v1395
        %v1597 = vunpack.c.l.b16 %v1396
        %v1598 = vunpack.c.h.b16 %v1396
        %v1599 = vunpack.c.l.b16 %v1397
        %v1600 = vunpack.c.h.b16 %v1397
        %v1601 = vunpack.c.l.b16 %v1398
        %v1602 = vunpack.c.h.b16 %v1398
        %v1603 = vunpack.c.l.b16 %v1399
        %v1604 = vunpack.c.h.b16 %v1399
        %v1605 = vunpack.c.l.b16 %v1400
        %v1606 = vunpack.c.h.b16 %v1400
        %v1607 = vunpack.c.l.b16 %v1401
        %v1608 = vunpack.c.h.b16 %v1401
        %v1609 = vunpack.c.l.b16 %v1402
        %v1610 = vunpack.c.h.b16 %v1402
        %v1611 = vunpack.c.l.b16 %v1403
        %v1612 = vunpack.c.h.b16 %v1403
        %v1613 = vunpack.c.l.b16 %v1404
        %v1614 = vunpack.c.h.b16 %v1404
        %v1615 = vunpack.c.l.b16 %v1405
        %v1616 = vunpack.c.h.b16 %v1405
        %v1617 = vunpack.c.l.b16 %v1406
        %v1618 = vunpack.c.h.b16 %v1406
        %v1619 = vunpack.c.l.b16 %v1407
        %v1620 = vunpack.c.h.b16 %v1407
        %v1621 = vunpack.c.l.b16 %v1408
        %v1622 = vunpack.c.h.b16 %v1408
        %v1623 = vpack.c.b16 %v1499, %v1495
        %v1624 = vpack.c.b16 %v1500, %v1496
        %v1625 = vpack.c.b16 %v1501, %v1497
        %v1626 = vpack.c.b16 %v1502, %v1498
        %v1627 = vpack.c.b16 %v1507, %v1503
        %v1628 = vpack.c.b16 %v1508, %v1504
        %v1629 = vpack.c.b16 %v1509, %v1505
        %v1630 = vpack.c.b16 %v1510, %v1506
        %v1631 = vpack.c.b16 %v1515, %v1511
        %v1632 = vpack.c.b16 %v1516, %v1512
        %v1633 = vpack.c.b16 %v1517, %v1513
        %v1634 = vpack.c.b16 %v1518, %v1514
        %v1635 = vpack.c.b16 %v1523, %v1519
        %v1636 = vpack.c.b16 %v1524, %v1520
        %v1637 = vpack.c.b16 %v1525, %v1521
        %v1638 = vpack.c.b16 %v1526, %v1522
        %v1639 = vpack.c.b16 %v1531, %v1527
        %v1640 = vpack.c.b16 %v1532, %v1528
        %v1641 = vpack.c.b16 %v1533, %v1529
        %v1642 = vpack.c.b16 %v1534, %v1530
        %v1643 = vpack.c.b16 %v1539, %v1535
        %v1644 = vpack.c.b16 %v1540, %v1536
        %v1645 = vpack.c.b16 %v1541, %v1537
        %v1646 = vpack.c.b16 %v1542, %v1538
        %v1647 = vpack.c.b16 %v1547, %v1543
        %v1648 = vpack.c.b16 %v1548, %v1544
        %v1649 = vpack.c.b16 %v1549, %v1545
        %v1650 = vpack.c.b16 %v1550, %v1546
        %v1651 = vpack.c.b16 %v1555, %v1551
        %v1652 = vpack.c.b16 %v1556, %v1552
        %v1653 = vpack.c.b16 %v1557, %v1553
        %v1654 = vpack.c.b16 %v1558, %v1554
        %v1655 = vpack.c.b16 %v1563, %v1559
        %v1656 = vpack.c.b16 %v1564, %v1560
        %v1657 = vpack.c.b16 %v1565, %v1561
        %v1658 = vpack.c.b16 %v1566, %v1562
        %v1659 = vpack.c.b16 %v1571, %v1567
        %v1660 = vpack.c.b16 %v1572, %v1568
        %v1661 = vpack.c.b16 %v1573, %v1569
        %v1662 = vpack.c.b16 %v1574, %v1570
        %v1663 = vpack.c.b16 %v1579, %v1575
        %v1664 = vpack.c.b16 %v1580, %v1576
        %v1665 = vpack.c.b16 %v1581, %v1577
        %v1666 = vpack.c.b16 %v1582, %v1578
        %v1667 = vpack.c.b16 %v1587, %v1583
        %v1668 = vpack.c.b16 %v1588, %v1584
        %v1669 = vpack.c.b16 %v1589, %v1585
        %v1670 = vpack.c.b16 %v1590, %v1586
        %v1671 = vpack.c.b16 %v1595, %v1591
        %v1672 = vpack.c.b16 %v1596, %v1592
        %v1673 = vpack.c.b16 %v1597, %v1593
        %v1674 = vpack.c.b16 %v1598, %v1594
        %v1675 = vpack.c.b16 %v1603, %v1599
        %v1676 = vpack.c.b16 %v1604, %v1600
        %v1677 = vpack.c.b16 %v1605, %v1601
        %v1678 = vpack.c.b16 %v1606, %v1602
        %v1679 = vpack.c.b16 %v1611, %v1607
        %v1680 = vpack.c.b16 %v1612, %v1608
        %v1681 = vpack.c.b16 %v1613, %v1609
        %v1682 = vpack.c.b16 %v1614, %v1610
        %v1683 = vpack.c.b16 %v1619, %v1615
        %v1684 = vpack.c.b16 %v1620, %v1616
        %v1685 = vpack.c.b16 %v1621, %v1617
        %v1686 = vpack.c.b16 %v1622, %v1618
        %1751 = vmatprep.subr.bf16.mxu0 %v1624
        %1752 = vmatpush1.bf16.msra.mxu0 %v1623
        %1753 = vmatprep.subr.bf16.mxu0 %v1628
        %1754 = vmatpush1.bf16.msra.mxu0 %v1627
        %1755 = vmatprep.subr.bf16.mxu0 %v1632
        %1756 = vmatpush1.bf16.msra.mxu0 %v1631
        %1757 = vmatprep.subr.bf16.mxu0 %v1636
        %1758 = vmatpush1.bf16.msra.mxu0 %v1635
        %1759 = vmatprep.subr.bf16.mxu0 %v1640
        %1760 = vmatpush1.bf16.msra.mxu0 %v1639
        %1761 = vmatprep.subr.bf16.mxu0 %v1644
        %1762 = vmatpush1.bf16.msra.mxu0 %v1643
        %1763 = vmatprep.subr.bf16.mxu0 %v1648
        %1764 = vmatpush1.bf16.msra.mxu0 %v1647
        %1765 = vmatprep.subr.bf16.mxu0 %v1652
        %1766 = vmatpush1.bf16.msra.mxu0 %v1651
        %1767 = vmatprep.subr.bf16.mxu0 %v1656
        %1768 = vmatpush1.bf16.msra.mxu0 %v1655
        %1769 = vmatprep.subr.bf16.mxu0 %v1660
        %1770 = vmatpush1.bf16.msra.mxu0 %v1659
        %1771 = vmatprep.subr.bf16.mxu0 %v1664
        %1772 = vmatpush1.bf16.msra.mxu0 %v1663
        %1773 = vmatprep.subr.bf16.mxu0 %v1668
        %1774 = vmatpush1.bf16.msra.mxu0 %v1667
        %1775 = vmatprep.subr.bf16.mxu0 %v1672
        %1776 = vmatpush1.bf16.msra.mxu0 %v1671
        %1777 = vmatprep.subr.bf16.mxu0 %v1676
        %1778 = vmatpush1.bf16.msra.mxu0 %v1675
        %1779 = vmatprep.subr.bf16.mxu0 %v1680
        %1780 = vmatpush1.bf16.msra.mxu0 %v1679
        %1781 = vmatprep.subr.bf16.mxu0 %v1684
        %1782 = vmatpush1.bf16.msra.mxu0 %v1683
        %1783 = vmatprep.mubr.bf16.mxu0 %v1314
        %1784 = vmatmul.mubr.bf16.gmra.mrb[0].mxu0 %v1313
        %v1785 = vpop.f32.mrb[0].mxu0
        %v1786 = vadd.f32 %v1414, %v1785
        %v1787 = vpop.f32.mrb[0].mxu0
        %v1788 = vadd.f32 %v1418, %v1787
        %v1789 = vpop.f32.mrb[0].mxu0
        %v1790 = vadd.f32 %v1414, %v1789
        %v1791 = vpop.f32.mrb[0].mxu0
        %v1792 = vadd.f32 %v1418, %v1791
        %1793 = vmatprep.mubr.bf16.mxu0 %v1316
        %1794 = vmatmul.mubr.bf16.gmra.mrb[0].mxu0 %v1315
        %v1795 = vpop.f32.mrb[0].mxu0
        %v1796 = vadd.f32 %v1414, %v1795
        %v1797 = vpop.f32.mrb[0].mxu0
        %v1798 = vadd.f32 %v1418, %v1797
        %v1799 = vpop.f32.mrb[0].mxu0
        %v1800 = vadd.f32 %v1414, %v1799
        %v1801 = vpop.f32.mrb[0].mxu0
        %v1802 = vadd.f32 %v1418, %v1801
        %1803 = vmatprep.mubr.bf16.mxu0 %v1318
        %1804 = vmatmul.mubr.bf16.gmra.mrb[0].mxu0 %v1317
        %v1805 = vpop.f32.mrb[0].mxu0
        %v1806 = vadd.f32 %v1414, %v1805
        %v1807 = vpop.f32.mrb[0].mxu0
        %v1808 = vadd.f32 %v1418, %v1807
        %v1809 = vpop.f32.mrb[0].mxu0
        %v1810 = vadd.f32 %v1414, %v1809
        %v1811 = vpop.f32.mrb[0].mxu0
        %v1812 = vadd.f32 %v1418, %v1811
        %1813 = vmatprep.mubr.bf16.mxu0 %v1320
        %1814 = vmatmul.mubr.bf16.gmra.mrb[0].mxu0 %v1319
        %v1815 = vpop.f32.mrb[0].mxu0
        %v1816 = vadd.f32 %v1414, %v1815
        %v1817 = vpop.f32.mrb[0].mxu0
        %v1818 = vadd.f32 %v1418, %v1817
        %v1819 = vpop.f32.mrb[0].mxu0
        %v1820 = vadd.f32 %v1414, %v1819
        %v1821 = vpop.f32.mrb[0].mxu0
        %v1822 = vadd.f32 %v1418, %v1821
        %1823 = vmatprep.mubr.bf16.mxu0 %v1322
        %1824 = vmatmul.mubr.bf16.gmra.mrb[0].mxu0 %v1321
        %v1825 = vpop.f32.mrb[0].mxu0
        %v1826 = vadd.f32 %v1414, %v1825
        %v1827 = vpop.f32.mrb[0].mxu0
        %v1828 = vadd.f32 %v1418, %v1827
        %v1829 = vpop.f32.mrb[0].mxu0
        %v1830 = vadd.f32 %v1414, %v1829
        %v1831 = vpop.f32.mrb[0].mxu0
        %v1832 = vadd.f32 %v1418, %v1831
        %1833 = vmatprep.mubr.bf16.mxu0 %v1324
        %1834 = vmatmul.mubr.bf16.gmra.mrb[0].mxu0 %v1323
        %v1835 = vpop.f32.mrb[0].mxu0
        %v1836 = vadd.f32 %v1414, %v1835
        %v1837 = vpop.f32.mrb[0].mxu0
        %v1838 = vadd.f32 %v1418, %v1837
        %v1839 = vpop.f32.mrb[0].mxu0
        %v1840 = vadd.f32 %v1414, %v1839
        %v1841 = vpop.f32.mrb[0].mxu0
        %v1842 = vadd.f32 %v1418, %v1841
        %1843 = vmatprep.mubr.bf16.mxu0 %v1326
        %1844 = vmatmul.mubr.bf16.gmra.mrb[0].mxu0 %v1325
        %v1845 = vpop.f32.mrb[0].mxu0
        %v1846 = vadd.f32 %v1414, %v1845
        %v1847 = vpop.f32.mrb[0].mxu0
        %v1848 = vadd.f32 %v1418, %v1847
        %v1849 = vpop.f32.mrb[0].mxu0
        %v1850 = vadd.f32 %v1414, %v1849
        %v1851 = vpop.f32.mrb[0].mxu0
        %v1852 = vadd.f32 %v1418, %v1851
        %1853 = vmatprep.mubr.bf16.mxu0 %v1328
        %1854 = vmatmul.mubr.bf16.gmra.mrb[0].mxu0 %v1327
        %v1855 = vpop.f32.mrb[0].mxu0
        %v1856 = vadd.f32 %v1414, %v1855
        %v1857 = vpop.f32.mrb[0].mxu0
        %v1858 = vadd.f32 %v1418, %v1857
        %v1859 = vpop.f32.mrb[0].mxu0
        %v1860 = vadd.f32 %v1414, %v1859
        %v1861 = vpop.f32.mrb[0].mxu0
        %v1862 = vadd.f32 %v1418, %v1861
        %1863 = vmatprep.mubr.bf16.mxu0 %v1330
        %1864 = vmatmul.mubr.bf16.gmra.mrb[0].mxu0 %v1329
        %v1865 = vpop.f32.mrb[0].mxu0
        %v1866 = vadd.f32 %v1414, %v1865
        %v1867 = vpop.f32.mrb[0].mxu0
        %v1868 = vadd.f32 %v1418, %v1867
        %v1869 = vpop.f32.mrb[0].mxu0
        %v1870 = vadd.f32 %v1414, %v1869
        %v1871 = vpop.f32.mrb[0].mxu0
        %v1872 = vadd.f32 %v1418, %v1871
        %1873 = vmatprep.mubr.bf16.mxu0 %v1332
        %1874 = vmatmul.mubr.bf16.gmra.mrb[0].mxu0 %v1331
        %v1875 = vpop.f32.mrb[0].mxu0
        %v1876 = vadd.f32 %v1414, %v1875
        %v1877 = vpop.f32.mrb[0].mxu0
        %v1878 = vadd.f32 %v1418, %v1877
        %v1879 = vpop.f32.mrb[0].mxu0
        %v1880 = vadd.f32 %v1414, %v1879
        %v1881 = vpop.f32.mrb[0].mxu0
        %v1882 = vadd.f32 %v1418, %v1881
        %1883 = vmatprep.mubr.bf16.mxu0 %v1334
        %1884 = vmatmul.mubr.bf16.gmra.mrb[0].mxu0 %v1333
        %v1885 = vpop.f32.mrb[0].mxu0
        %v1886 = vadd.f32 %v1414, %v1885
        %v1887 = vpop.f32.mrb[0].mxu0
        %v1888 = vadd.f32 %v1418, %v1887
        %v1889 = vpop.f32.mrb[0].mxu0
        %v1890 = vadd.f32 %v1414, %v1889
        %v1891 = vpop.f32.mrb[0].mxu0
        %v1892 = vadd.f32 %v1418, %v1891
        %1893 = vmatprep.mubr.bf16.mxu0 %v1336
        %1894 = vmatmul.mubr.bf16.gmra.mrb[0].mxu0 %v1335
        %v1895 = vpop.f32.mrb[0].mxu0
        %v1896 = vadd.f32 %v1414, %v1895
        %v1897 = vpop.f32.mrb[0].mxu0
        %v1898 = vadd.f32 %v1418, %v1897
        %v1899 = vpop.f32.mrb[0].mxu0
        %v1900 = vadd.f32 %v1414, %v1899
        %v1901 = vpop.f32.mrb[0].mxu0
        %v1902 = vadd.f32 %v1418, %v1901
        %1903 = vmatprep.mubr.bf16.mxu0 %v1338
        %1904 = vmatmul.mubr.bf16.gmra.mrb[0].mxu0 %v1337
        %v1905 = vpop.f32.mrb[0].mxu0
        %v1906 = vadd.f32 %v1414, %v1905
        %v1907 = vpop.f32.mrb[0].mxu0
        %v1908 = vadd.f32 %v1418, %v1907
        %v1909 = vpop.f32.mrb[0].mxu0
        %v1910 = vadd.f32 %v1414, %v1909
        %v1911 = vpop.f32.mrb[0].mxu0
        %v1912 = vadd.f32 %v1418, %v1911
        %1913 = vmatprep.mubr.bf16.mxu0 %v1340
        %1914 = vmatmul.mubr.bf16.gmra.mrb[0].mxu0 %v1339
        %v1915 = vpop.f32.mrb[0].mxu0
        %v1916 = vadd.f32 %v1414, %v1915
        %v1917 = vpop.f32.mrb[0].mxu0
        %v1918 = vadd.f32 %v1418, %v1917
        %v1919 = vpop.f32.mrb[0].mxu0
        %v1920 = vadd.f32 %v1414, %v1919
        %v1921 = vpop.f32.mrb[0].mxu0
        %v1922 = vadd.f32 %v1418, %v1921
        %1923 = vmatprep.mubr.bf16.mxu0 %v1342
        %1924 = vmatmul.mubr.bf16.gmra.mrb[0].mxu0 %v1341
        %v1925 = vpop.f32.mrb[0].mxu0
        %v1926 = vadd.f32 %v1414, %v1925
        %v1927 = vpop.f32.mrb[0].mxu0
        %v1928 = vadd.f32 %v1418, %v1927
        %v1929 = vpop.f32.mrb[0].mxu0
        %v1930 = vadd.f32 %v1414, %v1929
        %v1931 = vpop.f32.mrb[0].mxu0
        %v1932 = vadd.f32 %v1418, %v1931
        %1933 = vmatprep.mubr.bf16.mxu0 %v1344
        %1934 = vmatmul.mubr.bf16.gmra.mrb[0].mxu0 %v1343
        %v1935 = vpop.f32.mrb[0].mxu0
        %v1936 = vadd.f32 %v1414, %v1935
        %v1937 = vpop.f32.mrb[0].mxu0
        %v1938 = vadd.f32 %v1418, %v1937
        %v1939 = vpop.f32.mrb[0].mxu0
        %v1940 = vadd.f32 %v1414, %v1939
        %v1941 = vpop.f32.mrb[0].mxu0
        %v1942 = vadd.f32 %v1418, %v1941
        %1943 = vdwg.mxu0
        %1944 = vmatprep.subr.bf16.mxu0 %v1626
        %1945 = vmatpush1.bf16.msra.mxu0 %v1625
        %1946 = vmatprep.subr.bf16.mxu0 %v1630
        %1947 = vmatpush1.bf16.msra.mxu0 %v1629
        %1948 = vmatprep.subr.bf16.mxu0 %v1634
        %1949 = vmatpush1.bf16.msra.mxu0 %v1633
        %1950 = vmatprep.subr.bf16.mxu0 %v1638
        %1951 = vmatpush1.bf16.msra.mxu0 %v1637
        %1952 = vmatprep.subr.bf16.mxu0 %v1642
        %1953 = vmatpush1.bf16.msra.mxu0 %v1641
        %1954 = vmatprep.subr.bf16.mxu0 %v1646
        %1955 = vmatpush1.bf16.msra.mxu0 %v1645
        %1956 = vmatprep.subr.bf16.mxu0 %v1650
        %1957 = vmatpush1.bf16.msra.mxu0 %v1649
        %1958 = vmatprep.subr.bf16.mxu0 %v1654
        %1959 = vmatpush1.bf16.msra.mxu0 %v1653
        %1960 = vmatprep.subr.bf16.mxu0 %v1658
        %1961 = vmatpush1.bf16.msra.mxu0 %v1657
        %1962 = vmatprep.subr.bf16.mxu0 %v1662
        %1963 = vmatpush1.bf16.msra.mxu0 %v1661
        %1964 = vmatprep.subr.bf16.mxu0 %v1666
        %1965 = vmatpush1.bf16.msra.mxu0 %v1665
        %1966 = vmatprep.subr.bf16.mxu0 %v1670
        %1967 = vmatpush1.bf16.msra.mxu0 %v1669
        %1968 = vmatprep.subr.bf16.mxu0 %v1674
        %1969 = vmatpush1.bf16.msra.mxu0 %v1673
        %1970 = vmatprep.subr.bf16.mxu0 %v1678
        %1971 = vmatpush1.bf16.msra.mxu0 %v1677
        %1972 = vmatprep.subr.bf16.mxu0 %v1682
        %1973 = vmatpush1.bf16.msra.mxu0 %v1681
        %1974 = vmatprep.subr.bf16.mxu0 %v1686
        %1975 = vmatpush1.bf16.msra.mxu0 %v1685
        %1976 = vmatprep.mubr.bf16.mxu0 %v1314
        %1977 = vmatmul.mubr.bf16.gmra.mrb[0].mxu0 %v1313
        %v1978 = vpop.f32.mrb[0].mxu0
        %v1979 = vadd.f32 %v1422, %v1978
        %v1980 = vpop.f32.mrb[0].mxu0
        %v1981 = vadd.f32 %v1426, %v1980
        %v1982 = vpop.f32.mrb[0].mxu0
        %v1983 = vadd.f32 %v1422, %v1982
        %v1984 = vpop.f32.mrb[0].mxu0
        %v1985 = vadd.f32 %v1426, %v1984
        %1986 = vmatprep.mubr.bf16.mxu0 %v1316
        %1987 = vmatmul.mubr.bf16.gmra.mrb[0].mxu0 %v1315
        %v1988 = vpop.f32.mrb[0].mxu0
        %v1989 = vadd.f32 %v1422, %v1988
        %v1990 = vpop.f32.mrb[0].mxu0
        %v1991 = vadd.f32 %v1426, %v1990
        %v1992 = vpop.f32.mrb[0].mxu0
        %v1993 = vadd.f32 %v1422, %v1992
        %v1994 = vpop.f32.mrb[0].mxu0
        %v1995 = vadd.f32 %v1426, %v1994
        %1996 = vmatprep.mubr.bf16.mxu0 %v1318
        %1997 = vmatmul.mubr.bf16.gmra.mrb[0].mxu0 %v1317
        %v1998 = vpop.f32.mrb[0].mxu0
        %v1999 = vadd.f32 %v1422, %v1998
        %v2000 = vpop.f32.mrb[0].mxu0
        %v2001 = vadd.f32 %v1426, %v2000
        %v2002 = vpop.f32.mrb[0].mxu0
        %v2003 = vadd.f32 %v1422, %v2002
        %v2004 = vpop.f32.mrb[0].mxu0
        %v2005 = vadd.f32 %v1426, %v2004
        %2006 = vmatprep.mubr.bf16.mxu0 %v1320
        %2007 = vmatmul.mubr.bf16.gmra.mrb[0].mxu0 %v1319
        %v2008 = vpop.f32.mrb[0].mxu0
        %v2009 = vadd.f32 %v1422, %v2008
        %v2010 = vpop.f32.mrb[0].mxu0
        %v2011 = vadd.f32 %v1426, %v2010
        %v2012 = vpop.f32.mrb[0].mxu0
        %v2013 = vadd.f32 %v1422, %v2012
        %v2014 = vpop.f32.mrb[0].mxu0
        %v2015 = vadd.f32 %v1426, %v2014
        %2016 = vmatprep.mubr.bf16.mxu0 %v1322
        %2017 = vmatmul.mubr.bf16.gmra.mrb[0].mxu0 %v1321
        %v2018 = vpop.f32.mrb[0].mxu0
        %v2019 = vadd.f32 %v1422, %v2018
        %v2020 = vpop.f32.mrb[0].mxu0
        %v2021 = vadd.f32 %v1426, %v2020
        %v2022 = vpop.f32.mrb[0].mxu0
        %v2023 = vadd.f32 %v1422, %v2022
        %v2024 = vpop.f32.mrb[0].mxu0
        %v2025 = vadd.f32 %v1426, %v2024
        %2026 = vmatprep.mubr.bf16.mxu0 %v1324
        %2027 = vmatmul.mubr.bf16.gmra.mrb[0].mxu0 %v1323
        %v2028 = vpop.f32.mrb[0].mxu0
        %v2029 = vadd.f32 %v1422, %v2028
        %v2030 = vpop.f32.mrb[0].mxu0
        %v2031 = vadd.f32 %v1426, %v2030
        %v2032 = vpop.f32.mrb[0].mxu0
        %v2033 = vadd.f32 %v1422, %v2032
        %v2034 = vpop.f32.mrb[0].mxu0
        %v2035 = vadd.f32 %v1426, %v2034
        %2036 = vmatprep.mubr.bf16.mxu0 %v1326
        %2037 = vmatmul.mubr.bf16.gmra.mrb[0].mxu0 %v1325
        %v2038 = vpop.f32.mrb[0].mxu0
        %v2039 = vadd.f32 %v1422, %v2038
        %v2040 = vpop.f32.mrb[0].mxu0
        %v2041 = vadd.f32 %v1426, %v2040
        %v2042 = vpop.f32.mrb[0].mxu0
        %v2043 = vadd.f32 %v1422, %v2042
        %v2044 = vpop.f32.mrb[0].mxu0
        %v2045 = vadd.f32 %v1426, %v2044
        %2046 = vmatprep.mubr.bf16.mxu0 %v1328
        %2047 = vmatmul.mubr.bf16.gmra.mrb[0].mxu0 %v1327
        %v2048 = vpop.f32.mrb[0].mxu0
        %v2049 = vadd.f32 %v1422, %v2048
        %v2050 = vpop.f32.mrb[0].mxu0
        %v2051 = vadd.f32 %v1426, %v2050
        %v2052 = vpop.f32.mrb[0].mxu0
        %v2053 = vadd.f32 %v1422, %v2052
        %v2054 = vpop.f32.mrb[0].mxu0
        %v2055 = vadd.f32 %v1426, %v2054
        %2056 = vmatprep.mubr.bf16.mxu0 %v1330
        %2057 = vmatmul.mubr.bf16.gmra.mrb[0].mxu0 %v1329
        %v2058 = vpop.f32.mrb[0].mxu0
        %v2059 = vadd.f32 %v1422, %v2058
        %v2060 = vpop.f32.mrb[0].mxu0
        %v2061 = vadd.f32 %v1426, %v2060
        %v2062 = vpop.f32.mrb[0].mxu0
        %v2063 = vadd.f32 %v1422, %v2062
        %v2064 = vpop.f32.mrb[0].mxu0
        %v2065 = vadd.f32 %v1426, %v2064
        %2066 = vmatprep.mubr.bf16.mxu0 %v1332
        %2067 = vmatmul.mubr.bf16.gmra.mrb[0].mxu0 %v1331
        %v2068 = vpop.f32.mrb[0].mxu0
        %v2069 = vadd.f32 %v1422, %v2068
        %v2070 = vpop.f32.mrb[0].mxu0
        %v2071 = vadd.f32 %v1426, %v2070
        %v2072 = vpop.f32.mrb[0].mxu0
        %v2073 = vadd.f32 %v1422, %v2072
        %v2074 = vpop.f32.mrb[0].mxu0
        %v2075 = vadd.f32 %v1426, %v2074
        %2076 = vmatprep.mubr.bf16.mxu0 %v1334
        %2077 = vmatmul.mubr.bf16.gmra.mrb[0].mxu0 %v1333
        %v2078 = vpop.f32.mrb[0].mxu0
        %v2079 = vadd.f32 %v1422, %v2078
        %v2080 = vpop.f32.mrb[0].mxu0
        %v2081 = vadd.f32 %v1426, %v2080
        %v2082 = vpop.f32.mrb[0].mxu0
        %v2083 = vadd.f32 %v1422, %v2082
        %v2084 = vpop.f32.mrb[0].mxu0
        %v2085 = vadd.f32 %v1426, %v2084
        %2086 = vmatprep.mubr.bf16.mxu0 %v1336
        %2087 = vmatmul.mubr.bf16.gmra.mrb[0].mxu0 %v1335
        %v2088 = vpop.f32.mrb[0].mxu0
        %v2089 = vadd.f32 %v1422, %v2088
        %v2090 = vpop.f32.mrb[0].mxu0
        %v2091 = vadd.f32 %v1426, %v2090
        %v2092 = vpop.f32.mrb[0].mxu0
        %v2093 = vadd.f32 %v1422, %v2092
        %v2094 = vpop.f32.mrb[0].mxu0
        %v2095 = vadd.f32 %v1426, %v2094
        %2096 = vmatprep.mubr.bf16.mxu0 %v1338
        %2097 = vmatmul.mubr.bf16.gmra.mrb[0].mxu0 %v1337
        %v2098 = vpop.f32.mrb[0].mxu0
        %v2099 = vadd.f32 %v1422, %v2098
        %v2100 = vpop.f32.mrb[0].mxu0
        %v2101 = vadd.f32 %v1426, %v2100
        %v2102 = vpop.f32.mrb[0].mxu0
        %v2103 = vadd.f32 %v1422, %v2102
        %v2104 = vpop.f32.mrb[0].mxu0
        %v2105 = vadd.f32 %v1426, %v2104
        %2106 = vmatprep.mubr.bf16.mxu0 %v1340
        %2107 = vmatmul.mubr.bf16.gmra.mrb[0].mxu0 %v1339
        %v2108 = vpop.f32.mrb[0].mxu0
        %v2109 = vadd.f32 %v1422, %v2108
        %v2110 = vpop.f32.mrb[0].mxu0
        %v2111 = vadd.f32 %v1426, %v2110
        %v2112 = vpop.f32.mrb[0].mxu0
        %v2113 = vadd.f32 %v1422, %v2112
        %v2114 = vpop.f32.mrb[0].mxu0
        %v2115 = vadd.f32 %v1426, %v2114
        %2116 = vmatprep.mubr.bf16.mxu0 %v1342
        %2117 = vmatmul.mubr.bf16.gmra.mrb[0].mxu0 %v1341
        %v2118 = vpop.f32.mrb[0].mxu0
        %v2119 = vadd.f32 %v1422, %v2118
        %v2120 = vpop.f32.mrb[0].mxu0
        %v2121 = vadd.f32 %v1426, %v2120
        %v2122 = vpop.f32.mrb[0].mxu0
        %v2123 = vadd.f32 %v1422, %v2122
        %v2124 = vpop.f32.mrb[0].mxu0
        %v2125 = vadd.f32 %v1426, %v2124
        %2126 = vmatprep.mubr.bf16.mxu0 %v1344
        %2127 = vmatmul.mubr.bf16.gmra.mrb[0].mxu0 %v1343
        %v2128 = vpop.f32.mrb[0].mxu0
        %v2129 = vadd.f32 %v1422, %v2128
        %v2130 = vpop.f32.mrb[0].mxu0
        %v2131 = vadd.f32 %v1426, %v2130
        %v2132 = vpop.f32.mrb[0].mxu0
        %v2133 = vadd.f32 %v1422, %v2132
        %v2134 = vpop.f32.mrb[0].mxu0
        %v2135 = vadd.f32 %v1426, %v2134
        %2136 = vdwg.mxu0
        %2137 = vst [vmem:[%s272] sm:$0xff] %v1786
        %2138 = vst [vmem:[%s272 + $0x8] sm:$0xff] %v1788
        %2139 = vst [vmem:[%s272 + $0x10] sm:$0xff] %v1979
        %2140 = vst [vmem:[%s272 + $0x18] sm:$0xff] %v1981
        %2141 = vst [vmem:[%s272 + $0x20] sm:$0xff] %v1790
        %2142 = vst [vmem:[%s272 + $0x28] sm:$0xff] %v1792
        %2143 = vst [vmem:[%s272 + $0x30] sm:$0xff] %v1983
        %2144 = vst [vmem:[%s272 + $0x38] sm:$0xff] %v1985
        %2145 = vst [vmem:[%s272 + $0x40] sm:$0xff] %v1796
        %2146 = vst [vmem:[%s272 + $0x48] sm:$0xff] %v1798
        %2147 = vst [vmem:[%s272 + $0x50] sm:$0xff] %v1989
        %2148 = vst [vmem:[%s272 + $0x58] sm:$0xff] %v1991
        %2149 = vst [vmem:[%s272 + $0x60] sm:$0xff] %v1800
        %2150 = vst [vmem:[%s272 + $0x68] sm:$0xff] %v1802
        %2151 = vst [vmem:[%s272 + $0x70] sm:$0xff] %v1993
        %2152 = vst [vmem:[%s272 + $0x78] sm:$0xff] %v1995
        %2153 = vst [vmem:[%s272 + $0x80] sm:$0xff] %v1806
        %2154 = vst [vmem:[%s272 + $0x88] sm:$0xff] %v1808
        %2155 = vst [vmem:[%s272 + $0x90] sm:$0xff] %v1999
        %2156 = vst [vmem:[%s272 + $0x98] sm:$0xff] %v2001
        %2157 = vst [vmem:[%s272 + $0xa0] sm:$0xff] %v1810
        %2158 = vst [vmem:[%s272 + $0xa8] sm:$0xff] %v1812
        %2159 = vst [vmem:[%s272 + $0xb0] sm:$0xff] %v2003
        %2160 = vst [vmem:[%s272 + $0xb8] sm:$0xff] %v2005
        %2161 = vst [vmem:[%s272 + $0xc0] sm:$0xff] %v1816
        %2162 = vst [vmem:[%s272 + $0xc8] sm:$0xff] %v1818
        %2163 = vst [vmem:[%s272 + $0xd0] sm:$0xff] %v2009
        %2164 = vst [vmem:[%s272 + $0xd8] sm:$0xff] %v2011
        %2165 = vst [vmem:[%s272 + $0xe0] sm:$0xff] %v1820
        %2166 = vst [vmem:[%s272 + $0xe8] sm:$0xff] %v1822
        %2167 = vst [vmem:[%s272 + $0xf0] sm:$0xff] %v2013
        %2168 = vst [vmem:[%s272 + $0xf8] sm:$0xff] %v2015
        %2169 = vst [vmem:[%s272 + $0x100] sm:$0xff] %v1826
        %2170 = vst [vmem:[%s272 + $0x108] sm:$0xff] %v1828
        %2171 = vst [vmem:[%s272 + $0x110] sm:$0xff] %v2019
        %2172 = vst [vmem:[%s272 + $0x118] sm:$0xff] %v2021
        %2173 = vst [vmem:[%s272 + $0x120] sm:$0xff] %v1830
        %2174 = vst [vmem:[%s272 + $0x128] sm:$0xff] %v1832
        %2175 = vst [vmem:[%s272 + $0x130] sm:$0xff] %v2023
        %2176 = vst [vmem:[%s272 + $0x138] sm:$0xff] %v2025
        %2177 = vst [vmem:[%s272 + $0x140] sm:$0xff] %v1836
        %2178 = vst [vmem:[%s272 + $0x148] sm:$0xff] %v1838
        %2179 = vst [vmem:[%s272 + $0x150] sm:$0xff] %v2029
        %2180 = vst [vmem:[%s272 + $0x158] sm:$0xff] %v2031
        %2181 = vst [vmem:[%s272 + $0x160] sm:$0xff] %v1840
        %2182 = vst [vmem:[%s272 + $0x168] sm:$0xff] %v1842
        %2183 = vst [vmem:[%s272 + $0x170] sm:$0xff] %v2033
        %2184 = vst [vmem:[%s272 + $0x178] sm:$0xff] %v2035
        %2185 = vst [vmem:[%s272 + $0x180] sm:$0xff] %v1846
        %2186 = vst [vmem:[%s272 + $0x188] sm:$0xff] %v1848
        %2187 = vst [vmem:[%s272 + $0x190] sm:$0xff] %v2039
        %2188 = vst [vmem:[%s272 + $0x198] sm:$0xff] %v2041
        %2189 = vst [vmem:[%s272 + $0x1a0] sm:$0xff] %v1850
        %2190 = vst [vmem:[%s272 + $0x1a8] sm:$0xff] %v1852
        %2191 = vst [vmem:[%s272 + $0x1b0] sm:$0xff] %v2043
        %2192 = vst [vmem:[%s272 + $0x1b8] sm:$0xff] %v2045
        %2193 = vst [vmem:[%s272 + $0x1c0] sm:$0xff] %v1856
        %2194 = vst [vmem:[%s272 + $0x1c8] sm:$0xff] %v1858
        %2195 = vst [vmem:[%s272 + $0x1d0] sm:$0xff] %v2049
        %2196 = vst [vmem:[%s272 + $0x1d8] sm:$0xff] %v2051
        %2197 = vst [vmem:[%s272 + $0x1e0] sm:$0xff] %v1860
        %2198 = vst [vmem:[%s272 + $0x1e8] sm:$0xff] %v1862
        %2199 = vst [vmem:[%s272 + $0x1f0] sm:$0xff] %v2053
        %2200 = vst [vmem:[%s272 + $0x1f8] sm:$0xff] %v2055
        %2201 = vst [vmem:[%s272 + $0x200] sm:$0xff] %v1866
        %2202 = vst [vmem:[%s272 + $0x208] sm:$0xff] %v1868
        %2203 = vst [vmem:[%s272 + $0x210] sm:$0xff] %v2059
        %2204 = vst [vmem:[%s272 + $0x218] sm:$0xff] %v2061
        %2205 = vst [vmem:[%s272 + $0x220] sm:$0xff] %v1870
        %2206 = vst [vmem:[%s272 + $0x228] sm:$0xff] %v1872
        %2207 = vst [vmem:[%s272 + $0x230] sm:$0xff] %v2063
        %2208 = vst [vmem:[%s272 + $0x238] sm:$0xff] %v2065
        %2209 = vst [vmem:[%s272 + $0x240] sm:$0xff] %v1876
        %2210 = vst [vmem:[%s272 + $0x248] sm:$0xff] %v1878
        %2211 = vst [vmem:[%s272 + $0x250] sm:$0xff] %v2069
        %2212 = vst [vmem:[%s272 + $0x258] sm:$0xff] %v2071
        %2213 = vst [vmem:[%s272 + $0x260] sm:$0xff] %v1880
        %2214 = vst [vmem:[%s272 + $0x268] sm:$0xff] %v1882
        %2215 = vst [vmem:[%s272 + $0x270] sm:$0xff] %v2073
        %2216 = vst [vmem:[%s272 + $0x278] sm:$0xff] %v2075
        %2217 = vst [vmem:[%s272 + $0x280] sm:$0xff] %v1886
        %2218 = vst [vmem:[%s272 + $0x288] sm:$0xff] %v1888
        %2219 = vst [vmem:[%s272 + $0x290] sm:$0xff] %v2079
        %2220 = vst [vmem:[%s272 + $0x298] sm:$0xff] %v2081
        %2221 = vst [vmem:[%s272 + $0x2a0] sm:$0xff] %v1890
        %2222 = vst [vmem:[%s272 + $0x2a8] sm:$0xff] %v1892
        %2223 = vst [vmem:[%s272 + $0x2b0] sm:$0xff] %v2083
        %2224 = vst [vmem:[%s272 + $0x2b8] sm:$0xff] %v2085
        %2225 = vst [vmem:[%s272 + $0x2c0] sm:$0xff] %v1896
        %2226 = vst [vmem:[%s272 + $0x2c8] sm:$0xff] %v1898
        %2227 = vst [vmem:[%s272 + $0x2d0] sm:$0xff] %v2089
        %2228 = vst [vmem:[%s272 + $0x2d8] sm:$0xff] %v2091
        %2229 = vst [vmem:[%s272 + $0x2e0] sm:$0xff] %v1900
        %2230 = vst [vmem:[%s272 + $0x2e8] sm:$0xff] %v1902
        %2231 = vst [vmem:[%s272 + $0x2f0] sm:$0xff] %v2093
        %2232 = vst [vmem:[%s272 + $0x2f8] sm:$0xff] %v2095
        %2233 = vst [vmem:[%s272 + $0x300] sm:$0xff] %v1906
        %2234 = vst [vmem:[%s272 + $0x308] sm:$0xff] %v1908
        %2235 = vst [vmem:[%s272 + $0x310] sm:$0xff] %v2099
        %2236 = vst [vmem:[%s272 + $0x318] sm:$0xff] %v2101
        %2237 = vst [vmem:[%s272 + $0x320] sm:$0xff] %v1910
        %2238 = vst [vmem:[%s272 + $0x328] sm:$0xff] %v1912
        %2239 = vst [vmem:[%s272 + $0x330] sm:$0xff] %v2103
        %2240 = vst [vmem:[%s272 + $0x338] sm:$0xff] %v2105
        %2241 = vst [vmem:[%s272 + $0x340] sm:$0xff] %v1916
        %2242 = vst [vmem:[%s272 + $0x348] sm:$0xff] %v1918
        %2243 = vst [vmem:[%s272 + $0x350] sm:$0xff] %v2109
        %2244 = vst [vmem:[%s272 + $0x358] sm:$0xff] %v2111
        %2245 = vst [vmem:[%s272 + $0x360] sm:$0xff] %v1920
        %2246 = vst [vmem:[%s272 + $0x368] sm:$0xff] %v1922
        %2247 = vst [vmem:[%s272 + $0x370] sm:$0xff] %v2113
        %2248 = vst [vmem:[%s272 + $0x378] sm:$0xff] %v2115
        %2249 = vst [vmem:[%s272 + $0x380] sm:$0xff] %v1926
        %2250 = vst [vmem:[%s272 + $0x388] sm:$0xff] %v1928
        %2251 = vst [vmem:[%s272 + $0x390] sm:$0xff] %v2119
        %2252 = vst [vmem:[%s272 + $0x398] sm:$0xff] %v2121
        %2253 = vst [vmem:[%s272 + $0x3a0] sm:$0xff] %v1930
        %2254 = vst [vmem:[%s272 + $0x3a8] sm:$0xff] %v1932
        %2255 = vst [vmem:[%s272 + $0x3b0] sm:$0xff] %v2123
        %2256 = vst [vmem:[%s272 + $0x3b8] sm:$0xff] %v2125
        %2257 = vst [vmem:[%s272 + $0x3c0] sm:$0xff] %v1936
        %2258 = vst [vmem:[%s272 + $0x3c8] sm:$0xff] %v1938
        %2259 = vst [vmem:[%s272 + $0x3d0] sm:$0xff] %v2129
        %2260 = vst [vmem:[%s272 + $0x3d8] sm:$0xff] %v2131
        %2261 = vst [vmem:[%s272 + $0x3e0] sm:$0xff] %v1940
        %2262 = vst [vmem:[%s272 + $0x3e8] sm:$0xff] %v1942
        %2263 = vst [vmem:[%s272 + $0x3f0] sm:$0xff] %v2133
        %2264 = vst [vmem:[%s272 + $0x3f8] sm:$0xff] %v2135
        %s2265 = sand.u32 %s141, 1
        %s2266 = scalar_lea.sflag [#allocation4], %s2265
        %s2267 = sand.u32 %s141, 1
        %s2268 = smul.addr %s2267, 1024
        %s2269 = scalar_lea.vmem [#allocation8], %s2268
        // Predicated region
        $region53: #{tpu_custom_call.1} parent=39 // pred_check
          %p2270 = pneg %p151
        $region54: #{tpu_custom_call.1} parent=39 // pred_check_branch
          %2272 = sbr.rel (%p2270) target = $region56
        $region55: #{tpu_custom_call.1} parent=39 // pred_region
          %s2273 = smul.u32 32, %s23
          %s2275 = ssub.s32 16384, 16384
          %2276 = vsyncadd %s2266, %s2275
          %s2277 = smul.addr %s2273, 4
          %s2278 = smul.addr %s2277, 128
          %s2279 = scalar_lea.hbm %s5, %s2278
          %s2280 = sshll.u32 %s2269, 4
          %s2281 = int_to_ptr.vmem [resolvable:$true] %s2280
          %2286 = dma.vmem_to_hbm [thread:$0]  %s2281, 16384, %s2279, %s2266, 512, 512, 32
        $region56: #{tpu_custom_call.1} parent=39 // pred_fallthru
          _
      $region40: #{tpu_custom_call.1} parent=5 // pred_fallthru
        _
      %p2287 = scmp.le.s32.totalorder 2, %s18
      // Predicated region
      $region57: #{tpu_custom_call.1} parent=5 // pred_check
        %p2288 = pneg %p2287
      $region58: #{tpu_custom_call.1} parent=5 // pred_check_branch
        %2290 = sbr.rel (%p2288) target = $region60
      $region59: #{tpu_custom_call.1} parent=5 // pred_region
        %s2291 = ssub.s32 %s18, 2
        // Predicated region
        $region61: #{tpu_custom_call.1} parent=59 // pred_check
          %p2292 = pneg %p157
        $region62: #{tpu_custom_call.1} parent=59 // pred_check_branch
          %2294 = sbr.rel (%p2292) target = $region64
        $region63: #{tpu_custom_call.1} parent=59 // pred_region
          %s2295 = sand.u32 %s142, 1
          %s2296 = scalar_lea.sflag [#allocation4], %s2295
          %s2297 = sand.u32 %s142, 1
          %s2298 = smul.addr %s2297, 1024
          %s2299 = scalar_lea.vmem [#allocation8], %s2298
          %2300 = dma.done %s2296, 16384
        $region64: #{tpu_custom_call.1} parent=59 // pred_fallthru
          _
      $region60: #{tpu_custom_call.1} parent=5 // pred_fallthru
        _
    $region6: #{tpu_custom_call.1} parent=1 // loop_footer
      %s22 = sadd.s32 1, %s18
    $region7: #{tpu_custom_call.1} parent=1 // loop_footer_branch
      %17 = sbr.rel target = $region3
    $region8: #{tpu_custom_call.1} parent=1 // loop_exit
      _
    %2301 = vsyncpa [#allocation3], 1
    %s2302 = scalar_lea.sflag [#allocation3], 1
    %2303 = vsyncpa %s2302, 1
    %2304 = vsyncpa [#allocation6], 1
    %2305 = vsyncpa [#allocation4], 1
    %s2306 = scalar_lea.sflag [#allocation4], 1
    %2307 = vsyncpa %s2306, 1

</llo_original>
